<compile_context>
chip_gen: v6e
topology: v6e:2x2x1
jax: 0.10.0
libtpu: 0.0.40
codegen_flags: <defaults>
</compile_context>

<pallas_src>
import functools

import jax
import jax.numpy as jnp
import numpy as np
from jax.experimental import pallas as pl
from jax.experimental.pallas import tpu as pltpu

EPS = 1e-5
NEG_SLOPE = 0.1


def _double_conv_kernel(x_ref, w1_ref, s1_ref, t1_ref, w2_ref, s2_ref, t2_ref,
                        o_ref, *, lane_dense: bool):
    # x_ref: (1, 1, TH+4, W+2, Cin) -- 2 halo rows each side, 1 zero col each side.
    _, _, th4, wp, cin = x_ref.shape
    th = th4 - 4               # output rows produced by this grid step
    w = wp - 2                 # output cols
    cmid = w1_ref.shape[1]
    cout = w2_ref.shape[1]
    h1 = th + 2                # conv1 rows needed by conv2 (tile + 1 halo row/side)

    x = x_ref[0, 0]            # (TH+4, W+2, Cin), matmul dtype (f32 or bf16)

    # ---------------- conv1: one im2col matmul, K = 9*Cin ----------------
    p1 = jnp.concatenate(
        [x[kh:kh + h1, kw:kw + w, :] for kh in range(3) for kw in range(3)],
        axis=-1,
    ).reshape(h1 * w, 9 * cin)
    y = jnp.dot(p1, w1_ref[...], preferred_element_type=jnp.float32)
    y = y * s1_ref[...] + t1_ref[...]              # conv bias folded into BN shift
    y = jnp.where(y >= 0, y, NEG_SLOPE * y)        # LeakyReLU(0.1)
    y = y.reshape(h1, w, cmid)

    # Halo rows that fall outside the image are conv2's *zero padding*, not real
    # conv1 outputs -> zero them on the first / last row tile of each image.
    t_idx = pl.program_id(1)
    n_tiles = pl.num_programs(1)
    r = jax.lax.broadcasted_iota(jnp.int32, (h1, 1, 1), 0)
    valid = jnp.logical_and(jnp.logical_or(t_idx > 0, r > 0),
                            jnp.logical_or(t_idx < n_tiles - 1, r < h1 - 1))
    y = jnp.where(valid, y, 0.0).astype(w2_ref.dtype)

    # conv2 zero padding along W: just two zero columns (no padded scratch).
    zcol = jnp.zeros((h1, 1, cmid), dtype=y.dtype)
    ypad = jnp.concatenate([zcol, y, zcol], axis=1)        # (h1, W+2, Cmid)

    # ---------------- conv2: one im2col matmul, K = 9*Cmid ----------------
    p2 = jnp.concatenate(
        [ypad[kh:kh + th, kw:kw + w, :] for kh in range(3) for kw in range(3)],
        axis=-1,
    ).reshape(th * w, 9 * cmid)
    z = jnp.dot(p2, w2_ref[...], preferred_element_type=jnp.float32)
    z = z * s2_ref[...] + t2_ref[...]
    z = jnp.where(z >= 0, z, NEG_SLOPE * z)

    if lane_dense:
        # Lane-dense (TH, W*Cout) slab -> unmasked wide stores.
        o_ref[0, 0] = z.reshape(th, w * cout).astype(o_ref.dtype)
    else:
        o_ref[0, 0] = z.astype(o_ref.dtype)


def _fold_bn(bias, gamma, beta, mean, var):
    # (conv + b) * s + (be - m*s)  ==  conv*s + (be + (b - m)*s)
    s = gamma / jnp.sqrt(var + EPS)
    t = beta + (bias - mean) * s
    return s, t


def _im2col_weights(w_oihw, dtype):
    # (Cout, Cin, 3, 3) -> (kh, kw, Cin, Cout) -> (9*Cin, Cout)
    cout, cin = w_oihw.shape[0], w_oihw.shape[1]
    return jnp.transpose(w_oihw, (2, 3, 1, 0)).reshape(9 * cin, cout).astype(dtype)


def _pick_tile_h(h, target):
    t = max(1, min(target, h))
    while h % t:
        t -= 1
    return t


def double_conv_pallas(x_nchw, params, *, tile_h=8,
                       matmul_dtype=jnp.float32, lane_dense_out=True):
    N, Cin, H, W = x_nchw.shape
    Cmid = params["w1"].shape[0]
    Cout = params["w2"].shape[0]

    TH = _pick_tile_h(H, tile_h)
    nT = H // TH
    Wp = W + 2

    s1, t1 = _fold_bn(params["b1"], params["g1"], params["be1"],
                      params["m1"], params["v1"])
    s2, t2 = _fold_bn(params["b2"], params["g2"], params["be2"],
                      params["m2"], params["v2"])

    # NCHW -> NHWC (channels on the lane dim); matmul inputs in matmul_dtype.
    x_nhwc = jnp.transpose(x_nchw, (0, 2, 3, 1)).astype(matmul_dtype)
    # 2 halo rows each side in H (two chained 3x3 convs), 1 zero col each side in W.
    xpad = jnp.pad(x_nhwc, ((0, 0), (2, 2), (1, 1), (0, 0)))

    # Overlapping (TH+4)-row windows per row tile so the kernel grid only needs
    # plain Blocked indexing.
    win = np.arange(nT)[:, None] * TH + np.arange(TH + 4)[None, :]   # (nT, TH+4)
    x_win = xpad[:, win, :, :]                                       # (N,nT,TH+4,Wp,Cin)

    w1r = _im2col_weights(params["w1"], matmul_dtype)   # (9*Cin,  Cmid)
    w2r = _im2col_weights(params["w2"], matmul_dtype)   # (9*Cmid, Cout)
    s1 = s1.reshape(1, Cmid).astype(jnp.float32)
    t1 = t1.reshape(1, Cmid).astype(jnp.float32)
    s2 = s2.reshape(1, Cout).astype(jnp.float32)
    t2 = t2.reshape(1, Cout).astype(jnp.float32)

    if lane_dense_out:
        out_shape = jax.ShapeDtypeStruct((N, nT, TH, W * Cout), jnp.float32)
        out_spec = pl.BlockSpec((1, 1, TH, W * Cout), lambda n, t: (n, t, 0, 0))
    else:
        out_shape = jax.ShapeDtypeStruct((N, nT, TH * W, Cout), jnp.float32)
        out_spec = pl.BlockSpec((1, 1, TH * W, Cout), lambda n, t: (n, t, 0, 0))

    flops = 2 * 9 * (N * nT * (TH + 2) * W * Cin * Cmid + N * H * W * Cmid * Cout)
    bytes_accessed = (x_win.nbytes + w1r.nbytes + w2r.nbytes
                      + s1.nbytes + t1.nbytes + s2.nbytes + t2.nbytes
                      + N * H * W * Cout * 4)

    kernel = functools.partial(_double_conv_kernel, lane_dense=lane_dense_out)

    out = pl.pallas_call(
        kernel,
        out_shape=out_shape,
        grid=(N, nT),
        in_specs=[
            pl.BlockSpec((1, 1, TH + 4, Wp, Cin), lambda n, t: (n, t, 0, 0, 0)),
            pl.BlockSpec((9 * Cin, Cmid), lambda n, t: (0, 0)),
            pl.BlockSpec((1, Cmid), lambda n, t: (0, 0)),
            pl.BlockSpec((1, Cmid), lambda n, t: (0, 0)),
            pl.BlockSpec((9 * Cmid, Cout), lambda n, t: (0, 0)),
            pl.BlockSpec((1, Cout), lambda n, t: (0, 0)),
            pl.BlockSpec((1, Cout), lambda n, t: (0, 0)),
        ],
        out_specs=out_spec,
        compiler_params=pltpu.CompilerParams(
            dimension_semantics=("parallel", "parallel"),
            vmem_limit_bytes=32 * 1024 * 1024,
        ),
        cost_estimate=pl.CostEstimate(flops=flops, transcendentals=0,
                                      bytes_accessed=bytes_accessed),
    )(x_win, w1r, s1, t1, w2r, s2, t2)

    # Both output layouts share the same element order -> one reshape covers both.
    out_nhwc = out.reshape(N, H, W, Cout)
    return jnp.transpose(out_nhwc, (0, 3, 1, 2))     # back to NCHW


def double_conv_ref(x_nchw, params):
    """Pure-JAX reference matching PyTorch (eval-mode BN) semantics, NCHW."""
    def conv(x, w, b):
        y = jax.lax.conv_general_dilated(
            x, w, window_strides=(1, 1), padding=((1, 1), (1, 1)),
            dimension_numbers=("NCHW", "OIHW", "NCHW"))
        return y + b[None, :, None, None]

    def bn(x, g, be, m, v):
        s = g / jnp.sqrt(v + EPS)
        t = be - m * s
        return x * s[None, :, None, None] + t[None, :, None, None]

    def lrelu(x):
        return jnp.where(x >= 0, x, NEG_SLOPE * x)

    y = lrelu(bn(conv(x_nchw, params["w1"], params["b1"]),
                 params["g1"], params["be1"], params["m1"], params["v1"]))
    z = lrelu(bn(conv(y, params["w2"], params["b2"]),
                 params["g2"], params["be2"], params["m2"], params["v2"]))
    return z


def make_params(key, in_channels, out_channels, mid_channels=None):
    if not mid_channels:
        mid_channels = out_channels
    ks = jax.random.split(key, 8)
    p = {
        "w1": 0.1 * jax.random.normal(ks[0], (mid_channels, in_channels, 3, 3), jnp.float32),
        "b1": 0.05 * jax.random.normal(ks[1], (mid_channels,), jnp.float32),
        "g1": 1.0 + 0.1 * jax.random.normal(ks[2], (mid_channels,), jnp.float32),
        "be1": 0.1 * jax.random.normal(ks[3], (mid_channels,), jnp.float32),
        "m1": 0.1 * jax.random.normal(ks[4], (mid_channels,), jnp.float32),
        "v1": 1.0 + 0.1 * jax.nn.softplus(jax.random.normal(ks[5], (mid_channels,), jnp.float32)),
        "w2": 0.1 * jax.random.normal(ks[6], (out_channels, mid_channels, 3, 3), jnp.float32),
        "b2": 0.05 * jax.random.normal(ks[7], (out_channels,), jnp.float32),
    }
    ks2 = jax.random.split(jax.random.fold_in(key, 1), 4)
    p["g2"] = 1.0 + 0.1 * jax.random.normal(ks2[0], (out_channels,), jnp.float32)
    p["be2"] = 0.1 * jax.random.normal(ks2[1], (out_channels,), jnp.float32)
    p["m2"] = 0.1 * jax.random.normal(ks2[2], (out_channels,), jnp.float32)
    p["v2"] = 1.0 + 0.1 * jax.nn.softplus(jax.random.normal(ks2[3], (out_channels,), jnp.float32))
    return p


if __name__ == "__main__":
    key = jax.random.PRNGKey(0)
    kx, kp = jax.random.split(key)

    N, Cin, H, W = 2, 4, 16, 16
    Cout = 8                      # mid_channels defaults to out_channels
    x = jax.random.normal(kx, (N, Cin, H, W), jnp.float32)
    params = make_params(kp, Cin, Cout)

    ref = jax.block_until_ready(double_conv_ref(x, params))

    def run(matmul_dtype):
        try:
            return jax.block_until_ready(
                double_conv_pallas(x, params, matmul_dtype=matmul_dtype,
                                   lane_dense_out=True))
        except Exception:
            # Fallback if this Mosaic build rejects the minor-dim reshape used by
            # the lane-dense store; kernel math is identical.
            return jax.block_until_ready(
                double_conv_pallas(x, params, matmul_dtype=matmul_dtype,
                                   lane_dense_out=False))

    # Strict check: f32 matmul inputs (v5e-style path).
    out_f32 = run(jnp.float32)
    np.testing.assert_allclose(np.asarray(out_f32), np.asarray(ref),
                               rtol=1e-4, atol=1e-4)

    # bf16 MXU inputs with f32 accumulation (v6e/v7x path); looser tolerance.
    out_bf16 = run(jnp.bfloat16)
    np.testing.assert_allclose(np.asarray(out_bf16), np.asarray(ref),
                               rtol=5e-2, atol=5e-2)

    print("KERNEL_OK")
</pallas_src>

<mosaic_0001>
module attributes {stable_mosaic.version = 11 : i64} {
  func.func @_double_conv_kernel(%arg0: i32, %arg1: i32, %arg2: memref<1x1x12x18x4xf32, #tpu.memory_space<vmem>>, %arg3: memref<36x8xf32, #tpu.memory_space<vmem>>, %arg4: memref<1x8xf32, #tpu.memory_space<vmem>>, %arg5: memref<1x8xf32, #tpu.memory_space<vmem>>, %arg6: memref<72x8xf32, #tpu.memory_space<vmem>>, %arg7: memref<1x8xf32, #tpu.memory_space<vmem>>, %arg8: memref<1x8xf32, #tpu.memory_space<vmem>>, %arg9: memref<1x1x8x128xf32, #tpu.memory_space<vmem>>) attributes {dimension_semantics = [#tpu.dimension_semantics<parallel>, #tpu.dimension_semantics<parallel>], iteration_bounds = array<i64: 2, 2>, scalar_prefetch = 0 : i64, scratch_operands = 0 : i64, tpu.core_type = #tpu.core_type<tc>, window_params = [{transform_indices = @transform_0, window_bounds = array<i64: 1, 1, 12, 18, 4>}, {pipeline_mode = #tpu.pipeline_mode<synchronous>, transform_indices = @transform_1, window_bounds = array<i64: 36, 8>}, {pipeline_mode = #tpu.pipeline_mode<synchronous>, transform_indices = @transform_2, window_bounds = array<i64: 1, 8>}, {pipeline_mode = #tpu.pipeline_mode<synchronous>, transform_indices = @transform_3, window_bounds = array<i64: 1, 8>}, {pipeline_mode = #tpu.pipeline_mode<synchronous>, transform_indices = @transform_4, window_bounds = array<i64: 72, 8>}, {pipeline_mode = #tpu.pipeline_mode<synchronous>, transform_indices = @transform_5, window_bounds = array<i64: 1, 8>}, {pipeline_mode = #tpu.pipeline_mode<synchronous>, transform_indices = @transform_6, window_bounds = array<i64: 1, 8>}, {transform_indices = @transform_7, window_bounds = array<i64: 1, 1, 8, 128>}]} {
    %c0 = arith.constant 0 : index
    %c0_0 = arith.constant 0 : index
    %c0_1 = arith.constant 0 : index
    %c0_2 = arith.constant 0 : index
    %c0_3 = arith.constant 0 : index
    %0 = vector.load %arg2[%c0, %c0_0, %c0_1, %c0_2, %c0_3] : memref<1x1x12x18x4xf32, #tpu.memory_space<vmem>>, vector<1x1x12x18x4xf32>
    %1 = vector.shape_cast %0 : vector<1x1x12x18x4xf32> to vector<12x18x4xf32>
    %2 = vector.extract_strided_slice %1 {offsets = [0, 0, 0], sizes = [10, 16, 4], strides = [1, 1, 1]} : vector<12x18x4xf32> to vector<10x16x4xf32>
    %3 = vector.extract_strided_slice %1 {offsets = [0, 1, 0], sizes = [10, 16, 4], strides = [1, 1, 1]} : vector<12x18x4xf32> to vector<10x16x4xf32>
    %4 = vector.extract_strided_slice %1 {offsets = [0, 2, 0], sizes = [10, 16, 4], strides = [1, 1, 1]} : vector<12x18x4xf32> to vector<10x16x4xf32>
    %5 = vector.extract_strided_slice %1 {offsets = [1, 0, 0], sizes = [10, 16, 4], strides = [1, 1, 1]} : vector<12x18x4xf32> to vector<10x16x4xf32>
    %6 = vector.extract_strided_slice %1 {offsets = [1, 1, 0], sizes = [10, 16, 4], strides = [1, 1, 1]} : vector<12x18x4xf32> to vector<10x16x4xf32>
    %7 = vector.extract_strided_slice %1 {offsets = [1, 2, 0], sizes = [10, 16, 4], strides = [1, 1, 1]} : vector<12x18x4xf32> to vector<10x16x4xf32>
    %8 = vector.extract_strided_slice %1 {offsets = [2, 0, 0], sizes = [10, 16, 4], strides = [1, 1, 1]} : vector<12x18x4xf32> to vector<10x16x4xf32>
    %9 = vector.extract_strided_slice %1 {offsets = [2, 1, 0], sizes = [10, 16, 4], strides = [1, 1, 1]} : vector<12x18x4xf32> to vector<10x16x4xf32>
    %10 = vector.extract_strided_slice %1 {offsets = [2, 2, 0], sizes = [10, 16, 4], strides = [1, 1, 1]} : vector<12x18x4xf32> to vector<10x16x4xf32>
    %11 = tpu.concatenate %2, %3, %4, %5, %6, %7, %8, %9, %10 in 2 : vector<10x16x4xf32>, vector<10x16x4xf32>, vector<10x16x4xf32>, vector<10x16x4xf32>, vector<10x16x4xf32>, vector<10x16x4xf32>, vector<10x16x4xf32>, vector<10x16x4xf32>, vector<10x16x4xf32> -> vector<10x16x36xf32>
    %12 = vector.shape_cast %11 : vector<10x16x36xf32> to vector<160x36xf32>
    %c0_4 = arith.constant 0 : index
    %c0_5 = arith.constant 0 : index
    %13 = vector.load %arg3[%c0_4, %c0_5] : memref<36x8xf32, #tpu.memory_space<vmem>>, vector<36x8xf32>
    %cst = arith.constant dense<0.000000e+00> : vector<160x8xf32>
    %14 = tpu.matmul %12, %13, %cst {dimension_numbers = #tpu.dot_dimension_numbers<[1], [0], [0], [1], [0, 0, 1, 1], [], []>} : vector<160x36xf32>, vector<36x8xf32>, vector<160x8xf32> -> vector<160x8xf32>
    %c0_6 = arith.constant 0 : index
    %c0_7 = arith.constant 0 : index
    %15 = vector.load %arg4[%c0_6, %c0_7] : memref<1x8xf32, #tpu.memory_space<vmem>>, vector<1x8xf32>
    %16 = vector.broadcast %15 : vector<1x8xf32> to vector<160x8xf32>
    %17 = arith.mulf %14, %16 : vector<160x8xf32>
    %c0_8 = arith.constant 0 : index
    %c0_9 = arith.constant 0 : index
    %18 = vector.load %arg5[%c0_8, %c0_9] : memref<1x8xf32, #tpu.memory_space<vmem>>, vector<1x8xf32>
    %19 = vector.broadcast %18 : vector<1x8xf32> to vector<160x8xf32>
    %20 = arith.addf %17, %19 : vector<160x8xf32>
    %cst_10 = arith.constant 0.000000e+00 : f32
    %21 = vector.broadcast %cst_10 : f32 to vector<160x8xf32>
    %22 = arith.cmpf oge, %20, %21 : vector<160x8xf32>
    %cst_11 = arith.constant 1.000000e-01 : f32
    %23 = vector.broadcast %cst_11 : f32 to vector<160x8xf32>
    %24 = arith.mulf %23, %20 : vector<160x8xf32>
    %25 = arith.select %22, %20, %24 : vector<160x8xi1>, vector<160x8xf32>
    %26 = vector.shape_cast %25 : vector<160x8xf32> to vector<10x16x8xf32>
    %27 = tpu.iota {dimensions = array<i32: 0>} : vector<10x1x1xi32>
    %c0_i32 = arith.constant 0 : i32
    %28 = arith.cmpi sgt, %arg1, %c0_i32 : i32
    %c0_i32_12 = arith.constant 0 : i32
    %29 = vector.broadcast %c0_i32_12 : i32 to vector<10x1x1xi32>
    %30 = arith.cmpi sgt, %27, %29 : vector<10x1x1xi32>
    %31 = vector.broadcast %28 : i1 to vector<10x1x1xi1>
    %32 = arith.ori %31, %30 : vector<10x1x1xi1>
    %c1_i32 = arith.constant 1 : i32
    %33 = arith.cmpi slt, %arg1, %c1_i32 : i32
    %c9_i32 = arith.constant 9 : i32
    %34 = vector.broadcast %c9_i32 : i32 to vector<10x1x1xi32>
    %35 = arith.cmpi slt, %27, %34 : vector<10x1x1xi32>
    %36 = vector.broadcast %33 : i1 to vector<10x1x1xi1>
    %37 = arith.ori %36, %35 : vector<10x1x1xi1>
    %38 = arith.andi %32, %37 : vector<10x1x1xi1>
    %cst_13 = arith.constant 0.000000e+00 : f32
    %39 = vector.shape_cast %38 : vector<10x1x1xi1> to vector<10x1x1xi1>
    %40 = vector.broadcast %39 : vector<10x1x1xi1> to vector<10x16x8xi1>
    %41 = vector.broadcast %cst_13 : f32 to vector<10x16x8xf32>
    %42 = arith.select %40, %26, %41 : vector<10x16x8xi1>, vector<10x16x8xf32>
    %cst_14 = arith.constant 0.000000e+00 : f32
    %43 = vector.broadcast %cst_14 : f32 to vector<10x1x8xf32>
    %44 = tpu.concatenate %43, %42, %43 in 1 : vector<10x1x8xf32>, vector<10x16x8xf32>, vector<10x1x8xf32> -> vector<10x18x8xf32>
    %45 = vector.extract_strided_slice %44 {offsets = [0, 0, 0], sizes = [8, 16, 8], strides = [1, 1, 1]} : vector<10x18x8xf32> to vector<8x16x8xf32>
    %46 = vector.extract_strided_slice %44 {offsets = [0, 1, 0], sizes = [8, 16, 8], strides = [1, 1, 1]} : vector<10x18x8xf32> to vector<8x16x8xf32>
    %47 = vector.extract_strided_slice %44 {offsets = [0, 2, 0], sizes = [8, 16, 8], strides = [1, 1, 1]} : vector<10x18x8xf32> to vector<8x16x8xf32>
    %48 = vector.extract_strided_slice %44 {offsets = [1, 0, 0], sizes = [8, 16, 8], strides = [1, 1, 1]} : vector<10x18x8xf32> to vector<8x16x8xf32>
    %49 = vector.extract_strided_slice %44 {offsets = [1, 1, 0], sizes = [8, 16, 8], strides = [1, 1, 1]} : vector<10x18x8xf32> to vector<8x16x8xf32>
    %50 = vector.extract_strided_slice %44 {offsets = [1, 2, 0], sizes = [8, 16, 8], strides = [1, 1, 1]} : vector<10x18x8xf32> to vector<8x16x8xf32>
    %51 = vector.extract_strided_slice %44 {offsets = [2, 0, 0], sizes = [8, 16, 8], strides = [1, 1, 1]} : vector<10x18x8xf32> to vector<8x16x8xf32>
    %52 = vector.extract_strided_slice %44 {offsets = [2, 1, 0], sizes = [8, 16, 8], strides = [1, 1, 1]} : vector<10x18x8xf32> to vector<8x16x8xf32>
    %53 = vector.extract_strided_slice %44 {offsets = [2, 2, 0], sizes = [8, 16, 8], strides = [1, 1, 1]} : vector<10x18x8xf32> to vector<8x16x8xf32>
    %54 = tpu.concatenate %45, %46, %47, %48, %49, %50, %51, %52, %53 in 2 : vector<8x16x8xf32>, vector<8x16x8xf32>, vector<8x16x8xf32>, vector<8x16x8xf32>, vector<8x16x8xf32>, vector<8x16x8xf32>, vector<8x16x8xf32>, vector<8x16x8xf32>, vector<8x16x8xf32> -> vector<8x16x72xf32>
    %55 = vector.shape_cast %54 : vector<8x16x72xf32> to vector<128x72xf32>
    %c0_15 = arith.constant 0 : index
    %c0_16 = arith.constant 0 : index
    %56 = vector.load %arg6[%c0_15, %c0_16] : memref<72x8xf32, #tpu.memory_space<vmem>>, vector<72x8xf32>
    %cst_17 = arith.constant dense<0.000000e+00> : vector<128x8xf32>
    %57 = tpu.matmul %55, %56, %cst_17 {dimension_numbers = #tpu.dot_dimension_numbers<[1], [0], [0], [1], [0, 0, 1, 1], [], []>} : vector<128x72xf32>, vector<72x8xf32>, vector<128x8xf32> -> vector<128x8xf32>
    %c0_18 = arith.constant 0 : index
    %c0_19 = arith.constant 0 : index
    %58 = vector.load %arg7[%c0_18, %c0_19] : memref<1x8xf32, #tpu.memory_space<vmem>>, vector<1x8xf32>
    %59 = vector.broadcast %58 : vector<1x8xf32> to vector<128x8xf32>
    %60 = arith.mulf %57, %59 : vector<128x8xf32>
    %c0_20 = arith.constant 0 : index
    %c0_21 = arith.constant 0 : index
    %61 = vector.load %arg8[%c0_20, %c0_21] : memref<1x8xf32, #tpu.memory_space<vmem>>, vector<1x8xf32>
    %62 = vector.broadcast %61 : vector<1x8xf32> to vector<128x8xf32>
    %63 = arith.addf %60, %62 : vector<128x8xf32>
    %cst_22 = arith.constant 0.000000e+00 : f32
    %64 = vector.broadcast %cst_22 : f32 to vector<128x8xf32>
    %65 = arith.cmpf oge, %63, %64 : vector<128x8xf32>
    %cst_23 = arith.constant 1.000000e-01 : f32
    %66 = vector.broadcast %cst_23 : f32 to vector<128x8xf32>
    %67 = arith.mulf %66, %63 : vector<128x8xf32>
    %68 = arith.select %65, %63, %67 : vector<128x8xi1>, vector<128x8xf32>
    %69 = vector.shape_cast %68 : vector<128x8xf32> to vector<8x128xf32>
    %c0_24 = arith.constant 0 : index
    %c0_25 = arith.constant 0 : index
    %c0_26 = arith.constant 0 : index
    %c0_27 = arith.constant 0 : index
    %70 = vector.load %arg9[%c0_24, %c0_25, %c0_26, %c0_27] : memref<1x1x8x128xf32, #tpu.memory_space<vmem>>, vector<1x1x8x128xf32>
    %71 = vector.shape_cast %70 : vector<1x1x8x128xf32> to vector<8x128xf32>
    %72 = vector.shape_cast %69 : vector<8x128xf32> to vector<1x1x8x128xf32>
    tpu.vector_store %arg9[%c0_24, %c0_25, %c0_26, %c0_27], %72 {strides = array<i32>} : memref<1x1x8x128xf32, #tpu.memory_space<vmem>>, vector<1x1x8x128xf32>,
    return
  }
  func.func @transform_0(%arg0: i32, %arg1: i32) -> (i32, i32, i32, i32, i32) {
    %c0_i32 = arith.constant 0 : i32
    %c0_i32_0 = arith.constant 0 : i32
    %c0_i32_1 = arith.constant 0 : i32
    %c0_i32_2 = arith.constant 0 : i32
    return %arg0, %arg1, %c0_i32, %c0_i32_0, %c0_i32_1 : i32, i32, i32, i32, i32
  }
  func.func @transform_1(%arg0: i32, %arg1: i32) -> (i32, i32) {
    %c0_i32 = arith.constant 0 : i32
    %c0_i32_0 = arith.constant 0 : i32
    %c0_i32_1 = arith.constant 0 : i32
    return %c0_i32, %c0_i32_0 : i32, i32
  }
  func.func @transform_2(%arg0: i32, %arg1: i32) -> (i32, i32) {
    %c0_i32 = arith.constant 0 : i32
    %c0_i32_0 = arith.constant 0 : i32
    %c0_i32_1 = arith.constant 0 : i32
    return %c0_i32, %c0_i32_0 : i32, i32
  }
  func.func @transform_3(%arg0: i32, %arg1: i32) -> (i32, i32) {
    %c0_i32 = arith.constant 0 : i32
    %c0_i32_0 = arith.constant 0 : i32
    %c0_i32_1 = arith.constant 0 : i32
    return %c0_i32, %c0_i32_0 : i32, i32
  }
  func.func @transform_4(%arg0: i32, %arg1: i32) -> (i32, i32) {
    %c0_i32 = arith.constant 0 : i32
    %c0_i32_0 = arith.constant 0 : i32
    %c0_i32_1 = arith.constant 0 : i32
    return %c0_i32, %c0_i32_0 : i32, i32
  }
  func.func @transform_5(%arg0: i32, %arg1: i32) -> (i32, i32) {
    %c0_i32 = arith.constant 0 : i32
    %c0_i32_0 = arith.constant 0 : i32
    %c0_i32_1 = arith.constant 0 : i32
    return %c0_i32, %c0_i32_0 : i32, i32
  }
  func.func @transform_6(%arg0: i32, %arg1: i32) -> (i32, i32) {
    %c0_i32 = arith.constant 0 : i32
    %c0_i32_0 = arith.constant 0 : i32
    %c0_i32_1 = arith.constant 0 : i32
    return %c0_i32, %c0_i32_0 : i32, i32
  }
  func.func @transform_7(%arg0: i32, %arg1: i32) -> (i32, i32, i32, i32) {
    %c0_i32 = arith.constant 0 : i32
    %c0_i32_0 = arith.constant 0 : i32
    %c0_i32_1 = arith.constant 0 : i32
    return %arg0, %arg1, %c0_i32, %c0_i32_0 : i32, i32, i32, i32
  }
}

module attributes {stable_mosaic.version = 11 : i64} {
  func.func @_double_conv_kernel(%arg0: i32, %arg1: i32, %arg2: memref<1x1x12x18x4xf32, #tpu.memory_space<vmem>>, %arg3: memref<36x8xf32, #tpu.memory_space<vmem>>, %arg4: memref<1x8xf32, #tpu.memory_space<vmem>>, %arg5: memref<1x8xf32, #tpu.memory_space<vmem>>, %arg6: memref<72x8xf32, #tpu.memory_space<vmem>>, %arg7: memref<1x8xf32, #tpu.memory_space<vmem>>, %arg8: memref<1x8xf32, #tpu.memory_space<vmem>>, %arg9: memref<1x1x128x8xf32, #tpu.memory_space<vmem>>) attributes {dimension_semantics = [#tpu.dimension_semantics<parallel>, #tpu.dimension_semantics<parallel>], iteration_bounds = array<i64: 2, 2>, scalar_prefetch = 0 : i64, scratch_operands = 0 : i64, tpu.core_type = #tpu.core_type<tc>, window_params = [{transform_indices = @transform_0, window_bounds = array<i64: 1, 1, 12, 18, 4>}, {pipeline_mode = #tpu.pipeline_mode<synchronous>, transform_indices = @transform_1, window_bounds = array<i64: 36, 8>}, {pipeline_mode = #tpu.pipeline_mode<synchronous>, transform_indices = @transform_2, window_bounds = array<i64: 1, 8>}, {pipeline_mode = #tpu.pipeline_mode<synchronous>, transform_indices = @transform_3, window_bounds = array<i64: 1, 8>}, {pipeline_mode = #tpu.pipeline_mode<synchronous>, transform_indices = @transform_4, window_bounds = array<i64: 72, 8>}, {pipeline_mode = #tpu.pipeline_mode<synchronous>, transform_indices = @transform_5, window_bounds = array<i64: 1, 8>}, {pipeline_mode = #tpu.pipeline_mode<synchronous>, transform_indices = @transform_6, window_bounds = array<i64: 1, 8>}, {transform_indices = @transform_7, window_bounds = array<i64: 1, 1, 128, 8>}]} {
    %c0 = arith.constant 0 : index
    %c0_0 = arith.constant 0 : index
    %c0_1 = arith.constant 0 : index
    %c0_2 = arith.constant 0 : index
    %c0_3 = arith.constant 0 : index
    %0 = vector.load %arg2[%c0, %c0_0, %c0_1, %c0_2, %c0_3] : memref<1x1x12x18x4xf32, #tpu.memory_space<vmem>>, vector<1x1x12x18x4xf32>
    %1 = vector.shape_cast %0 : vector<1x1x12x18x4xf32> to vector<12x18x4xf32>
    %2 = vector.extract_strided_slice %1 {offsets = [0, 0, 0], sizes = [10, 16, 4], strides = [1, 1, 1]} : vector<12x18x4xf32> to vector<10x16x4xf32>
    %3 = vector.extract_strided_slice %1 {offsets = [0, 1, 0], sizes = [10, 16, 4], strides = [1, 1, 1]} : vector<12x18x4xf32> to vector<10x16x4xf32>
    %4 = vector.extract_strided_slice %1 {offsets = [0, 2, 0], sizes = [10, 16, 4], strides = [1, 1, 1]} : vector<12x18x4xf32> to vector<10x16x4xf32>
    %5 = vector.extract_strided_slice %1 {offsets = [1, 0, 0], sizes = [10, 16, 4], strides = [1, 1, 1]} : vector<12x18x4xf32> to vector<10x16x4xf32>
    %6 = vector.extract_strided_slice %1 {offsets = [1, 1, 0], sizes = [10, 16, 4], strides = [1, 1, 1]} : vector<12x18x4xf32> to vector<10x16x4xf32>
    %7 = vector.extract_strided_slice %1 {offsets = [1, 2, 0], sizes = [10, 16, 4], strides = [1, 1, 1]} : vector<12x18x4xf32> to vector<10x16x4xf32>
    %8 = vector.extract_strided_slice %1 {offsets = [2, 0, 0], sizes = [10, 16, 4], strides = [1, 1, 1]} : vector<12x18x4xf32> to vector<10x16x4xf32>
    %9 = vector.extract_strided_slice %1 {offsets = [2, 1, 0], sizes = [10, 16, 4], strides = [1, 1, 1]} : vector<12x18x4xf32> to vector<10x16x4xf32>
    %10 = vector.extract_strided_slice %1 {offsets = [2, 2, 0], sizes = [10, 16, 4], strides = [1, 1, 1]} : vector<12x18x4xf32> to vector<10x16x4xf32>
    %11 = tpu.concatenate %2, %3, %4, %5, %6, %7, %8, %9, %10 in 2 : vector<10x16x4xf32>, vector<10x16x4xf32>, vector<10x16x4xf32>, vector<10x16x4xf32>, vector<10x16x4xf32>, vector<10x16x4xf32>, vector<10x16x4xf32>, vector<10x16x4xf32>, vector<10x16x4xf32> -> vector<10x16x36xf32>
    %12 = vector.shape_cast %11 : vector<10x16x36xf32> to vector<160x36xf32>
    %c0_4 = arith.constant 0 : index
    %c0_5 = arith.constant 0 : index
    %13 = vector.load %arg3[%c0_4, %c0_5] : memref<36x8xf32, #tpu.memory_space<vmem>>, vector<36x8xf32>
    %cst = arith.constant dense<0.000000e+00> : vector<160x8xf32>
    %14 = tpu.matmul %12, %13, %cst {dimension_numbers = #tpu.dot_dimension_numbers<[1], [0], [0], [1], [0, 0, 1, 1], [], []>} : vector<160x36xf32>, vector<36x8xf32>, vector<160x8xf32> -> vector<160x8xf32>
    %c0_6 = arith.constant 0 : index
    %c0_7 = arith.constant 0 : index
    %15 = vector.load %arg4[%c0_6, %c0_7] : memref<1x8xf32, #tpu.memory_space<vmem>>, vector<1x8xf32>
    %16 = vector.broadcast %15 : vector<1x8xf32> to vector<160x8xf32>
    %17 = arith.mulf %14, %16 : vector<160x8xf32>
    %c0_8 = arith.constant 0 : index
    %c0_9 = arith.constant 0 : index
    %18 = vector.load %arg5[%c0_8, %c0_9] : memref<1x8xf32, #tpu.memory_space<vmem>>, vector<1x8xf32>
    %19 = vector.broadcast %18 : vector<1x8xf32> to vector<160x8xf32>
    %20 = arith.addf %17, %19 : vector<160x8xf32>
    %cst_10 = arith.constant 0.000000e+00 : f32
    %21 = vector.broadcast %cst_10 : f32 to vector<160x8xf32>
    %22 = arith.cmpf oge, %20, %21 : vector<160x8xf32>
    %cst_11 = arith.constant 1.000000e-01 : f32
    %23 = vector.broadcast %cst_11 : f32 to vector<160x8xf32>
    %24 = arith.mulf %23, %20 : vector<160x8xf32>
    %25 = arith.select %22, %20, %24 : vector<160x8xi1>, vector<160x8xf32>
    %26 = vector.shape_cast %25 : vector<160x8xf32> to vector<10x16x8xf32>
    %27 = tpu.iota {dimensions = array<i32: 0>} : vector<10x1x1xi32>
    %c0_i32 = arith.constant 0 : i32
    %28 = arith.cmpi sgt, %arg1, %c0_i32 : i32
    %c0_i32_12 = arith.constant 0 : i32
    %29 = vector.broadcast %c0_i32_12 : i32 to vector<10x1x1xi32>
    %30 = arith.cmpi sgt, %27, %29 : vector<10x1x1xi32>
    %31 = vector.broadcast %28 : i1 to vector<10x1x1xi1>
    %32 = arith.ori %31, %30 : vector<10x1x1xi1>
    %c1_i32 = arith.constant 1 : i32
    %33 = arith.cmpi slt, %arg1, %c1_i32 : i32
    %c9_i32 = arith.constant 9 : i32
    %34 = vector.broadcast %c9_i32 : i32 to vector<10x1x1xi32>
    %35 = arith.cmpi slt, %27, %34 : vector<10x1x1xi32>
    %36 = vector.broadcast %33 : i1 to vector<10x1x1xi1>
    %37 = arith.ori %36, %35 : vector<10x1x1xi1>
    %38 = arith.andi %32, %37 : vector<10x1x1xi1>
    %cst_13 = arith.constant 0.000000e+00 : f32
    %39 = vector.shape_cast %38 : vector<10x1x1xi1> to vector<10x1x1xi1>
    %40 = vector.broadcast %39 : vector<10x1x1xi1> to vector<10x16x8xi1>
    %41 = vector.broadcast %cst_13 : f32 to vector<10x16x8xf32>
    %42 = arith.select %40, %26, %41 : vector<10x16x8xi1>, vector<10x16x8xf32>
    %cst_14 = arith.constant 0.000000e+00 : f32
    %43 = vector.broadcast %cst_14 : f32 to vector<10x1x8xf32>
    %44 = tpu.concatenate %43, %42, %43 in 1 : vector<10x1x8xf32>, vector<10x16x8xf32>, vector<10x1x8xf32> -> vector<10x18x8xf32>
    %45 = vector.extract_strided_slice %44 {offsets = [0, 0, 0], sizes = [8, 16, 8], strides = [1, 1, 1]} : vector<10x18x8xf32> to vector<8x16x8xf32>
    %46 = vector.extract_strided_slice %44 {offsets = [0, 1, 0], sizes = [8, 16, 8], strides = [1, 1, 1]} : vector<10x18x8xf32> to vector<8x16x8xf32>
    %47 = vector.extract_strided_slice %44 {offsets = [0, 2, 0], sizes = [8, 16, 8], strides = [1, 1, 1]} : vector<10x18x8xf32> to vector<8x16x8xf32>
    %48 = vector.extract_strided_slice %44 {offsets = [1, 0, 0], sizes = [8, 16, 8], strides = [1, 1, 1]} : vector<10x18x8xf32> to vector<8x16x8xf32>
    %49 = vector.extract_strided_slice %44 {offsets = [1, 1, 0], sizes = [8, 16, 8], strides = [1, 1, 1]} : vector<10x18x8xf32> to vector<8x16x8xf32>
    %50 = vector.extract_strided_slice %44 {offsets = [1, 2, 0], sizes = [8, 16, 8], strides = [1, 1, 1]} : vector<10x18x8xf32> to vector<8x16x8xf32>
    %51 = vector.extract_strided_slice %44 {offsets = [2, 0, 0], sizes = [8, 16, 8], strides = [1, 1, 1]} : vector<10x18x8xf32> to vector<8x16x8xf32>
    %52 = vector.extract_strided_slice %44 {offsets = [2, 1, 0], sizes = [8, 16, 8], strides = [1, 1, 1]} : vector<10x18x8xf32> to vector<8x16x8xf32>
    %53 = vector.extract_strided_slice %44 {offsets = [2, 2, 0], sizes = [8, 16, 8], strides = [1, 1, 1]} : vector<10x18x8xf32> to vector<8x16x8xf32>
    %54 = tpu.concatenate %45, %46, %47, %48, %49, %50, %51, %52, %53 in 2 : vector<8x16x8xf32>, vector<8x16x8xf32>, vector<8x16x8xf32>, vector<8x16x8xf32>, vector<8x16x8xf32>, vector<8x16x8xf32>, vector<8x16x8xf32>, vector<8x16x8xf32>, vector<8x16x8xf32> -> vector<8x16x72xf32>
    %55 = vector.shape_cast %54 : vector<8x16x72xf32> to vector<128x72xf32>
    %c0_15 = arith.constant 0 : index
    %c0_16 = arith.constant 0 : index
    %56 = vector.load %arg6[%c0_15, %c0_16] : memref<72x8xf32, #tpu.memory_space<vmem>>, vector<72x8xf32>
    %cst_17 = arith.constant dense<0.000000e+00> : vector<128x8xf32>
    %57 = tpu.matmul %55, %56, %cst_17 {dimension_numbers = #tpu.dot_dimension_numbers<[1], [0], [0], [1], [0, 0, 1, 1], [], []>} : vector<128x72xf32>, vector<72x8xf32>, vector<128x8xf32> -> vector<128x8xf32>
    %c0_18 = arith.constant 0 : index
    %c0_19 = arith.constant 0 : index
    %58 = vector.load %arg7[%c0_18, %c0_19] : memref<1x8xf32, #tpu.memory_space<vmem>>, vector<1x8xf32>
    %59 = vector.broadcast %58 : vector<1x8xf32> to vector<128x8xf32>
    %60 = arith.mulf %57, %59 : vector<128x8xf32>
    %c0_20 = arith.constant 0 : index
    %c0_21 = arith.constant 0 : index
    %61 = vector.load %arg8[%c0_20, %c0_21] : memref<1x8xf32, #tpu.memory_space<vmem>>, vector<1x8xf32>
    %62 = vector.broadcast %61 : vector<1x8xf32> to vector<128x8xf32>
    %63 = arith.addf %60, %62 : vector<128x8xf32>
    %cst_22 = arith.constant 0.000000e+00 : f32
    %64 = vector.broadcast %cst_22 : f32 to vector<128x8xf32>
    %65 = arith.cmpf oge, %63, %64 : vector<128x8xf32>
    %cst_23 = arith.constant 1.000000e-01 : f32
    %66 = vector.broadcast %cst_23 : f32 to vector<128x8xf32>
    %67 = arith.mulf %66, %63 : vector<128x8xf32>
    %68 = arith.select %65, %63, %67 : vector<128x8xi1>, vector<128x8xf32>
    %c0_24 = arith.constant 0 : index
    %c0_25 = arith.constant 0 : index
    %c0_26 = arith.constant 0 : index
    %c0_27 = arith.constant 0 : index
    %69 = vector.load %arg9[%c0_24, %c0_25, %c0_26, %c0_27] : memref<1x1x128x8xf32, #tpu.memory_space<vmem>>, vector<1x1x128x8xf32>
    %70 = vector.shape_cast %69 : vector<1x1x128x8xf32> to vector<128x8xf32>
    %71 = vector.shape_cast %68 : vector<128x8xf32> to vector<1x1x128x8xf32>
    tpu.vector_store %arg9[%c0_24, %c0_25, %c0_26, %c0_27], %71 {strides = array<i32>} : memref<1x1x128x8xf32, #tpu.memory_space<vmem>>, vector<1x1x128x8xf32>,
    return
  }
  func.func @transform_0(%arg0: i32, %arg1: i32) -> (i32, i32, i32, i32, i32) {
    %c0_i32 = arith.constant 0 : i32
    %c0_i32_0 = arith.constant 0 : i32
    %c0_i32_1 = arith.constant 0 : i32
    %c0_i32_2 = arith.constant 0 : i32
    return %arg0, %arg1, %c0_i32, %c0_i32_0, %c0_i32_1 : i32, i32, i32, i32, i32
  }
  func.func @transform_1(%arg0: i32, %arg1: i32) -> (i32, i32) {
    %c0_i32 = arith.constant 0 : i32
    %c0_i32_0 = arith.constant 0 : i32
    %c0_i32_1 = arith.constant 0 : i32
    return %c0_i32, %c0_i32_0 : i32, i32
  }
  func.func @transform_2(%arg0: i32, %arg1: i32) -> (i32, i32) {
    %c0_i32 = arith.constant 0 : i32
    %c0_i32_0 = arith.constant 0 : i32
    %c0_i32_1 = arith.constant 0 : i32
    return %c0_i32, %c0_i32_0 : i32, i32
  }
  func.func @transform_3(%arg0: i32, %arg1: i32) -> (i32, i32) {
    %c0_i32 = arith.constant 0 : i32
    %c0_i32_0 = arith.constant 0 : i32
    %c0_i32_1 = arith.constant 0 : i32
    return %c0_i32, %c0_i32_0 : i32, i32
  }
  func.func @transform_4(%arg0: i32, %arg1: i32) -> (i32, i32) {
    %c0_i32 = arith.constant 0 : i32
    %c0_i32_0 = arith.constant 0 : i32
    %c0_i32_1 = arith.constant 0 : i32
    return %c0_i32, %c0_i32_0 : i32, i32
  }
  func.func @transform_5(%arg0: i32, %arg1: i32) -> (i32, i32) {
    %c0_i32 = arith.constant 0 : i32
    %c0_i32_0 = arith.constant 0 : i32
    %c0_i32_1 = arith.constant 0 : i32
    return %c0_i32, %c0_i32_0 : i32, i32
  }
  func.func @transform_6(%arg0: i32, %arg1: i32) -> (i32, i32) {
    %c0_i32 = arith.constant 0 : i32
    %c0_i32_0 = arith.constant 0 : i32
    %c0_i32_1 = arith.constant 0 : i32
    return %c0_i32, %c0_i32_0 : i32, i32
  }
  func.func @transform_7(%arg0: i32, %arg1: i32) -> (i32, i32, i32, i32) {
    %c0_i32 = arith.constant 0 : i32
    %c0_i32_0 = arith.constant 0 : i32
    %c0_i32_1 = arith.constant 0 : i32
    return %arg0, %arg1, %c0_i32, %c0_i32_0 : i32, i32, i32, i32
  }
}

</mosaic_0001>

<llo_original>
// kernel: tpu_custom_call.1
$region0: #{tpu_custom_call.1}
  #allocation0 [shape = 'u32[]', space=smem, size = 0x4, offset = 0x4, fixed_abs, tag = 'smem constant byte address 0x4 - core index']
  #allocation1 [shape = 'u32[144,128]{1,0:T(1,128)}', space=vmem, size = 0x12000, scoped, tag = 'internal scratch']
  %s0 = inlined_call_operand.vmem [shape: f32[2,2,12,18,4], index: 0, kind: input, shape index: {}]
  %s1 = inlined_call_operand.vmem [shape: f32[36,8], index: 1, kind: input, shape index: {}]
  %s2 = inlined_call_operand.vmem [shape: f32[1,8], index: 2, kind: input, shape index: {}]
  %s3 = inlined_call_operand.vmem [shape: f32[1,8], index: 3, kind: input, shape index: {}]
  %s4 = inlined_call_operand.vmem [shape: f32[72,8], index: 4, kind: input, shape index: {}]
  %s5 = inlined_call_operand.vmem [shape: f32[1,8], index: 5, kind: input, shape index: {}]
  %s6 = inlined_call_operand.vmem [shape: f32[1,8], index: 6, kind: input, shape index: {}]
  %s7 = inlined_call_operand.vmem [shape: f32[2,2,128,8], index: 7, kind: output, shape index: {}]
  %s8 = sld [smem:[#allocation0]]
  $region61: #{tpu_custom_call.1} parent=0
    _
  %s10 = ssub.s32 1, %s8
  %s11 = scalar_select 0, %s10, %s8
  loop: start=0, step=1, limit=6
  $region2: #{tpu_custom_call.1} parent=0 // loop_pre_header
    _
  $region3: #{tpu_custom_call.1} parent=0 // loop_header
    %s13 = sphi 0, %s17
    %p14 = scmp.ge.s32.totalorder %s13, 6
    %s20 = sphi 0, %s32
    %s21 = sphi 0, %s28
    %s22 = sphi 0, %s20
    %s23 = sphi 0, %s21
    %s24 = sphi 0, %s22
    %s25 = sphi 0, %s23
    %s37 = sphi 0, %s39
    %s40 = sphi 0, %s37
    %s41 = sphi 0, %s40
    %s57 = sphi 0, %s41
    %s61 = sphi 0, %s61
    %s63 = sphi 0, %s61
    %s64 = sphi 0, %s63
    %s78 = sphi 0, %s64
    %s82 = sphi 0, %s82
    %s84 = sphi 0, %s82
    %s85 = sphi 0, %s84
    %s99 = sphi 0, %s85
    %s103 = sphi 0, %s103
    %s105 = sphi 0, %s103
    %s106 = sphi 0, %s105
    %s120 = sphi 0, %s106
    %s124 = sphi 0, %s124
    %s126 = sphi 0, %s124
    %s127 = sphi 0, %s126
    %s141 = sphi 0, %s127
    %s145 = sphi 0, %s145
    %s147 = sphi 0, %s145
    %s148 = sphi 0, %s147
    %s162 = sphi 0, %s148
    %s166 = sphi 0, %s166
    %s168 = sphi 0, %s166
    %s169 = sphi 0, %s168
    %s183 = sphi 0, %s169
    %s191 = sphi 0, %s193
    %s194 = sphi 0, %s191
    %s195 = sphi 0, %s194
    %s211 = sphi 0, %s195
  $region4: #{tpu_custom_call.1} parent=0 // loop_header_branch
    %16 = sbr.rel (%p14) target = $region8
  $region5: #{tpu_custom_call.1} parent=0 // loop_body
    %s18 = ssub.s32 %s13, 1
    %s19 = ssub.s32 %s13, 2
    %s26 = sadd.s32 1, %s21
    %p27 = scmp.ge.s32.totalorder %s26, 2
    %s28 = scalar_select %p27, 0, %s26
    %s29 = sadd.s32 1, %s20
    %s30 = scalar_select %p27, %s29, %s20
    %p31 = scmp.ge.s32.totalorder %s30, 2
    %s32 = scalar_select %p31, 0, %s30
    %s33 = ssub.s32 %s20, %s32
    %s34 = ssub.s32 %s21, %s28
    %s35 = sor.u32 %s33, %s34
    %p36 = scmp.eq.s32.totalorder %s35, 0
    %s38 = sadd.s32 %s37, 1
    %s39 = scalar_select %p36, %s37, %s38
    %p42 = pneg %p36
    %p43 = scmp.eq.s32.totalorder %s13, 3
    %p44 = por %p42, %p43
    %p45 = scmp.ne.s32.totalorder %s37, %s40
    %p46 = scmp.eq.s32.totalorder %s13, 0
    %p47 = por %p45, %p46
    %p48 = scmp.ne.s32.totalorder %s37, %s40
    %p49 = scmp.eq.s32.totalorder %s18, 3
    %p50 = por %p48, %p49
    %p51 = scmp.ne.s32.totalorder %s40, %s41
    %p52 = scmp.eq.s32.totalorder %s18, 0
    %p53 = por %p51, %p52
    %p54 = scmp.ne.s32.totalorder %s40, %s41
    %p55 = scmp.eq.s32.totalorder %s19, 3
    %p56 = por %p54, %p55
    %p58 = scmp.ne.s32.totalorder %s41, %s57
    %p59 = scmp.eq.s32.totalorder %s19, 0
    %p60 = por %p58, %p59
    %s62 = sadd.s32 %s61, 1
    %p65 = scmp.eq.s32.totalorder %s13, 3
    %p66 = scmp.ne.s32.totalorder %s61, %s63
    %p67 = scmp.eq.s32.totalorder %s13, 0
    %p68 = por %p66, %p67
    %p69 = scmp.ne.s32.totalorder %s61, %s63
    %p70 = scmp.eq.s32.totalorder %s18, 3
    %p71 = por %p69, %p70
    %p72 = scmp.ne.s32.totalorder %s63, %s64
    %p73 = scmp.eq.s32.totalorder %s18, 0
    %p74 = por %p72, %p73
    %p75 = scmp.ne.s32.totalorder %s63, %s64
    %p76 = scmp.eq.s32.totalorder %s19, 3
    %p77 = por %p75, %p76
    %p79 = scmp.ne.s32.totalorder %s64, %s78
    %p80 = scmp.eq.s32.totalorder %s19, 0
    %p81 = por %p79, %p80
    %s83 = sadd.s32 %s82, 1
    %p86 = scmp.eq.s32.totalorder %s13, 3
    %p87 = scmp.ne.s32.totalorder %s82, %s84
    %p88 = scmp.eq.s32.totalorder %s13, 0
    %p89 = por %p87, %p88
    %p90 = scmp.ne.s32.totalorder %s82, %s84
    %p91 = scmp.eq.s32.totalorder %s18, 3
    %p92 = por %p90, %p91
    %p93 = scmp.ne.s32.totalorder %s84, %s85
    %p94 = scmp.eq.s32.totalorder %s18, 0
    %p95 = por %p93, %p94
    %p96 = scmp.ne.s32.totalorder %s84, %s85
    %p97 = scmp.eq.s32.totalorder %s19, 3
    %p98 = por %p96, %p97
    %p100 = scmp.ne.s32.totalorder %s85, %s99
    %p101 = scmp.eq.s32.totalorder %s19, 0
    %p102 = por %p100, %p101
    %s104 = sadd.s32 %s103, 1
    %p107 = scmp.eq.s32.totalorder %s13, 3
    %p108 = scmp.ne.s32.totalorder %s103, %s105
    %p109 = scmp.eq.s32.totalorder %s13, 0
    %p110 = por %p108, %p109
    %p111 = scmp.ne.s32.totalorder %s103, %s105
    %p112 = scmp.eq.s32.totalorder %s18, 3
    %p113 = por %p111, %p112
    %p114 = scmp.ne.s32.totalorder %s105, %s106
    %p115 = scmp.eq.s32.totalorder %s18, 0
    %p116 = por %p114, %p115
    %p117 = scmp.ne.s32.totalorder %s105, %s106
    %p118 = scmp.eq.s32.totalorder %s19, 3
    %p119 = por %p117, %p118
    %p121 = scmp.ne.s32.totalorder %s106, %s120
    %p122 = scmp.eq.s32.totalorder %s19, 0
    %p123 = por %p121, %p122
    %s125 = sadd.s32 %s124, 1
    %p128 = scmp.eq.s32.totalorder %s13, 3
    %p129 = scmp.ne.s32.totalorder %s124, %s126
    %p130 = scmp.eq.s32.totalorder %s13, 0
    %p131 = por %p129, %p130
    %p132 = scmp.ne.s32.totalorder %s124, %s126
    %p133 = scmp.eq.s32.totalorder %s18, 3
    %p134 = por %p132, %p133
    %p135 = scmp.ne.s32.totalorder %s126, %s127
    %p136 = scmp.eq.s32.totalorder %s18, 0
    %p137 = por %p135, %p136
    %p138 = scmp.ne.s32.totalorder %s126, %s127
    %p139 = scmp.eq.s32.totalorder %s19, 3
    %p140 = por %p138, %p139
    %p142 = scmp.ne.s32.totalorder %s127, %s141
    %p143 = scmp.eq.s32.totalorder %s19, 0
    %p144 = por %p142, %p143
    %s146 = sadd.s32 %s145, 1
    %p149 = scmp.eq.s32.totalorder %s13, 3
    %p150 = scmp.ne.s32.totalorder %s145, %s147
    %p151 = scmp.eq.s32.totalorder %s13, 0
    %p152 = por %p150, %p151
    %p153 = scmp.ne.s32.totalorder %s145, %s147
    %p154 = scmp.eq.s32.totalorder %s18, 3
    %p155 = por %p153, %p154
    %p156 = scmp.ne.s32.totalorder %s147, %s148
    %p157 = scmp.eq.s32.totalorder %s18, 0
    %p158 = por %p156, %p157
    %p159 = scmp.ne.s32.totalorder %s147, %s148
    %p160 = scmp.eq.s32.totalorder %s19, 3
    %p161 = por %p159, %p160
    %p163 = scmp.ne.s32.totalorder %s148, %s162
    %p164 = scmp.eq.s32.totalorder %s19, 0
    %p165 = por %p163, %p164
    %s167 = sadd.s32 %s166, 1
    %p170 = scmp.eq.s32.totalorder %s13, 3
    %p171 = scmp.ne.s32.totalorder %s166, %s168
    %p172 = scmp.eq.s32.totalorder %s13, 0
    %p173 = por %p171, %p172
    %p174 = scmp.ne.s32.totalorder %s166, %s168
    %p175 = scmp.eq.s32.totalorder %s18, 3
    %p176 = por %p174, %p175
    %p177 = scmp.ne.s32.totalorder %s168, %s169
    %p178 = scmp.eq.s32.totalorder %s18, 0
    %p179 = por %p177, %p178
    %p180 = scmp.ne.s32.totalorder %s168, %s169
    %p181 = scmp.eq.s32.totalorder %s19, 3
    %p182 = por %p180, %p181
    %p184 = scmp.ne.s32.totalorder %s169, %s183
    %p185 = scmp.eq.s32.totalorder %s19, 0
    %p186 = por %p184, %p185
    %s187 = ssub.s32 %s20, %s32
    %s188 = ssub.s32 %s21, %s28
    %s189 = sor.u32 %s187, %s188
    %p190 = scmp.eq.s32.totalorder %s189, 0
    %s192 = sadd.s32 %s191, 1
    %s193 = scalar_select %p190, %s191, %s192
    %p196 = pneg %p190
    %p197 = scmp.eq.s32.totalorder %s13, 3
    %p198 = por %p196, %p197
    %p199 = scmp.ne.s32.totalorder %s191, %s194
    %p200 = scmp.eq.s32.totalorder %s13, 0
    %p201 = por %p199, %p200
    %p202 = scmp.ne.s32.totalorder %s191, %s194
    %p203 = scmp.eq.s32.totalorder %s18, 3
    %p204 = por %p202, %p203
    %p205 = scmp.ne.s32.totalorder %s194, %s195
    %p206 = scmp.eq.s32.totalorder %s18, 0
    %p207 = por %p205, %p206
    %p208 = scmp.ne.s32.totalorder %s194, %s195
    %p209 = scmp.eq.s32.totalorder %s19, 3
    %p210 = por %p208, %p209
    %p212 = scmp.ne.s32.totalorder %s195, %s211
    %p213 = scmp.eq.s32.totalorder %s19, 0
    %p214 = por %p212, %p213
    %p215 = scmp.le.s32.totalorder 1, %s13
    %p216 = scmp.lt.s32.totalorder %s13, 5
    %p217 = pnand %p215, %p216
    %p218 = pneg %p217
    // Predicated region
    $region9: #{tpu_custom_call.1} parent=5 // pred_check
      _
    $region10: #{tpu_custom_call.1} parent=5 // pred_check_branch
      %220 = sbr.rel (%p217) target = $region12
    $region11: #{tpu_custom_call.1} parent=5 // pred_region
      %s221 = ssub.s32 %s13, 1
      // Predicated region
      $region13: #{tpu_custom_call.1} parent=11 // pred_check
        %p222 = pneg %p74
      $region14: #{tpu_custom_call.1} parent=11 // pred_check_branch
        %224 = sbr.rel (%p222) target = $region16
      $region15: #{tpu_custom_call.1} parent=11 // pred_region
        _
      $region16: #{tpu_custom_call.1} parent=11 // pred_fallthru
        _
      // Predicated region
      $region17: #{tpu_custom_call.1} parent=11 // pred_check
        %p225 = pneg %p95
      $region18: #{tpu_custom_call.1} parent=11 // pred_check_branch
        %227 = sbr.rel (%p225) target = $region20
      $region19: #{tpu_custom_call.1} parent=11 // pred_region
        _
      $region20: #{tpu_custom_call.1} parent=11 // pred_fallthru
        _
      // Predicated region
      $region21: #{tpu_custom_call.1} parent=11 // pred_check
        %p228 = pneg %p116
      $region22: #{tpu_custom_call.1} parent=11 // pred_check_branch
        %230 = sbr.rel (%p228) target = $region24
      $region23: #{tpu_custom_call.1} parent=11 // pred_region
        _
      $region24: #{tpu_custom_call.1} parent=11 // pred_fallthru
        _
      // Predicated region
      $region25: #{tpu_custom_call.1} parent=11 // pred_check
        %p231 = pneg %p137
      $region26: #{tpu_custom_call.1} parent=11 // pred_check_branch
        %233 = sbr.rel (%p231) target = $region28
      $region27: #{tpu_custom_call.1} parent=11 // pred_region
        _
      $region28: #{tpu_custom_call.1} parent=11 // pred_fallthru
        _
      // Predicated region
      $region29: #{tpu_custom_call.1} parent=11 // pred_check
        %p234 = pneg %p158
      $region30: #{tpu_custom_call.1} parent=11 // pred_check_branch
        %236 = sbr.rel (%p234) target = $region32
      $region31: #{tpu_custom_call.1} parent=11 // pred_region
        _
      $region32: #{tpu_custom_call.1} parent=11 // pred_fallthru
        _
      // Predicated region
      $region33: #{tpu_custom_call.1} parent=11 // pred_check
        %p237 = pneg %p179
      $region34: #{tpu_custom_call.1} parent=11 // pred_check_branch
        %239 = sbr.rel (%p237) target = $region36
      $region35: #{tpu_custom_call.1} parent=11 // pred_region
        _
      $region36: #{tpu_custom_call.1} parent=11 // pred_fallthru
        _
    $region12: #{tpu_custom_call.1} parent=5 // pred_fallthru
      _
    %p240 = scmp.lt.s32.totalorder %s13, 4
    // Predicated region
    $region37: #{tpu_custom_call.1} parent=5 // pred_check
      %p241 = pneg %p240
    $region38: #{tpu_custom_call.1} parent=5 // pred_check_branch
      %243 = sbr.rel (%p241) target = $region40
    $region39: #{tpu_custom_call.1} parent=5 // pred_region
      // Predicated region
      $region41: #{tpu_custom_call.1} parent=39 // pred_check
        %p244 = pneg %p47
      $region42: #{tpu_custom_call.1} parent=39 // pred_check_branch
        %246 = sbr.rel (%p244) target = $region44
      $region43: #{tpu_custom_call.1} parent=39 // pred_region
        %p247 = scmp.lt.s32.totalorder %s20, 1
        %s248 = scalar_select %p247, %s20, 1
        %p249 = scmp.lt.s32.totalorder %s21, 1
        %s250 = scalar_select %p249, %s21, 1
        %s251 = smul.addr %s250, 36
        %s252 = smul.addr %s248, 72
        %s253 = sadd.s32 %s251, %s252
        %s254 = smul.addr %s253, 8
        %s255 = scalar_lea.vmem %s0, %s254
      $region44: #{tpu_custom_call.1} parent=39 // pred_fallthru
        _
    $region40: #{tpu_custom_call.1} parent=5 // pred_fallthru
      _
    %p256 = scmp.le.s32.totalorder 1, %s13
    %p257 = scmp.lt.s32.totalorder %s13, 5
    %p258 = pnand %p256, %p257
    %p259 = pneg %p258
    // Predicated region
    $region45: #{tpu_custom_call.1} parent=5 // pred_check
      _
    $region46: #{tpu_custom_call.1} parent=5 // pred_check_branch
      %261 = sbr.rel (%p258) target = $region48
    $region47: #{tpu_custom_call.1} parent=5 // pred_region
      %s262 = ssub.s32 %s13, 1
      %p263 = scmp.lt.s32.totalorder %s22, 1
      %s264 = scalar_select %p263, %s22, 1
      %p265 = scmp.lt.s32.totalorder %s23, 1
      %s266 = scalar_select %p265, %s23, 1
      %s267 = smul.addr %s266, 36
      %s268 = smul.addr %s264, 72
      %s269 = sadd.s32 %s267, %s268
      %s270 = smul.addr %s269, 8
      %s271 = scalar_lea.vmem %s0, %s270
      %p272 = pneg %p53
      %p273 = pneg %p50
      %p274 = pneg %p74
      %p275 = pneg %p71
      %p276 = pneg %p95
      %p277 = pneg %p92
      %p278 = pneg %p116
      %p279 = pneg %p113
      %p280 = pneg %p137
      %p281 = pneg %p134
      %p282 = pneg %p158
      %p283 = pneg %p155
      %p284 = pneg %p179
      %p285 = pneg %p176
      %p286 = pneg %p207
      %p287 = pneg %p204
      %p288 = scmp.lt.s32.totalorder %s22, 1
      %s289 = scalar_select %p288, %s22, 1
      %p290 = scmp.lt.s32.totalorder %s23, 1
      %s291 = scalar_select %p290, %s23, 1
      %s292 = smul.addr %s291, 16
      %s293 = smul.addr %s289, 32
      %s294 = sadd.s32 %s292, %s293
      %s295 = smul.addr %s294, 8
      %s296 = scalar_lea.vmem %s7, %s295
      %p297 = scmp.lt.s32.totalorder %s22, 1
      %s298 = scalar_select %p297, %s22, 1
      %p299 = scmp.lt.s32.totalorder %s23, 1
      %s300 = scalar_select %p299, %s23, 1
      %s301 = smul.addr %s300, 36
      %s302 = smul.addr %s298, 72
      %s303 = sadd.s32 %s301, %s302
      %s304 = smul.addr %s303, 8
      %s305 = scalar_lea.vmem %s0, %s304
      %p306 = scmp.lt.s32.totalorder %s22, 1
      %s307 = scalar_select %p306, %s22, 1
      %p308 = scmp.lt.s32.totalorder %s23, 1
      %s309 = scalar_select %p308, %s23, 1
      %s310 = smul.addr %s309, 16
      %s311 = smul.addr %s307, 32
      %s312 = sadd.s32 %s310, %s311
      %s313 = smul.addr %s312, 8
      %s314 = scalar_lea.vmem %s7, %s313
      %v315 = vld [vmem:[%s305] sm:$0xff]
      %v316 = vld [vmem:[%s305 + $0x8] sm:$0xff]
      %v317 = vld [vmem:[%s305 + $0x10] sm:$0x3]
      %v318 = vld [vmem:[%s305 + $0x18] sm:$0xff]
      %v319 = vld [vmem:[%s305 + $0x20] sm:$0xff]
      %v320 = vld [vmem:[%s305 + $0x28] sm:$0x3]
      %v321 = vld [vmem:[%s305 + $0x30] sm:$0xff]
      %v322 = vld [vmem:[%s305 + $0x38] sm:$0xff]
      %v323 = vld [vmem:[%s305 + $0x40] sm:$0x3]
      %v324 = vld [vmem:[%s305 + $0x48] sm:$0xff]
      %v325 = vld [vmem:[%s305 + $0x50] sm:$0xff]
      %v326 = vld [vmem:[%s305 + $0x58] sm:$0x3]
      %v327 = vld [vmem:[%s305 + $0x60] sm:$0xff]
      %v328 = vld [vmem:[%s305 + $0x68] sm:$0xff]
      %v329 = vld [vmem:[%s305 + $0x70] sm:$0x3]
      %v330 = vld [vmem:[%s305 + $0x78] sm:$0xff]
      %v331 = vld [vmem:[%s305 + $0x80] sm:$0xff]
      %v332 = vld [vmem:[%s305 + $0x88] sm:$0x3]
      %v333 = vld [vmem:[%s305 + $0x90] sm:$0xff]
      %v334 = vld [vmem:[%s305 + $0x98] sm:$0xff]
      %v335 = vld [vmem:[%s305 + $0xa0] sm:$0x3]
      %v336 = vld [vmem:[%s305 + $0xa8] sm:$0xff]
      %v337 = vld [vmem:[%s305 + $0xb0] sm:$0xff]
      %v338 = vld [vmem:[%s305 + $0xb8] sm:$0x3]
      %v339 = vld [vmem:[%s305 + $0xc0] sm:$0xff]
      %v340 = vld [vmem:[%s305 + $0xc8] sm:$0xff]
      %v341 = vld [vmem:[%s305 + $0xd0] sm:$0x3]
      %v342 = vld [vmem:[%s305 + $0xd8] sm:$0xff]
      %v343 = vld [vmem:[%s305 + $0xe0] sm:$0xff]
      %v344 = vld [vmem:[%s305 + $0xe8] sm:$0x3]
      %v345 = vld [vmem:[%s305 + $0xf0] sm:$0xff]
      %v346 = vld [vmem:[%s305 + $0xf8] sm:$0xff]
      %v347 = vld [vmem:[%s305 + $0x100] sm:$0x3]
      %v348 = vld [vmem:[%s305 + $0x108] sm:$0xff]
      %v349 = vld [vmem:[%s305 + $0x110] sm:$0xff]
      %v350 = vld [vmem:[%s305 + $0x118] sm:$0x3]
      %vm381 = vcmask 1046528
      %v382 = vrot.slane %v315, 1
      %v383 = vrot.slane %v316, 1
      %v384 = vsel %vm381, %v382, %v383
      %v385 = vrot.slane %v317, 1
      %v386 = vsel %vm381, %v383, %v385
      %v387 = vrot.slane %v318, 1
      %v388 = vrot.slane %v319, 1
      %v389 = vsel %vm381, %v387, %v388
      %v390 = vrot.slane %v320, 1
      %v391 = vsel %vm381, %v388, %v390
      %v392 = vrot.slane %v321, 1
      %v393 = vrot.slane %v322, 1
      %v394 = vsel %vm381, %v392, %v393
      %v395 = vrot.slane %v323, 1
      %v396 = vsel %vm381, %v393, %v395
      %v397 = vrot.slane %v324, 1
      %v398 = vrot.slane %v325, 1
      %v399 = vsel %vm381, %v397, %v398
      %v400 = vrot.slane %v326, 1
      %v401 = vsel %vm381, %v398, %v400
      %v402 = vrot.slane %v327, 1
      %v403 = vrot.slane %v328, 1
      %v404 = vsel %vm381, %v402, %v403
      %v405 = vrot.slane %v329, 1
      %v406 = vsel %vm381, %v403, %v405
      %v407 = vrot.slane %v330, 1
      %v408 = vrot.slane %v331, 1
      %v409 = vsel %vm381, %v407, %v408
      %v410 = vrot.slane %v332, 1
      %v411 = vsel %vm381, %v408, %v410
      %v412 = vrot.slane %v333, 1
      %v413 = vrot.slane %v334, 1
      %v414 = vsel %vm381, %v412, %v413
      %v415 = vrot.slane %v335, 1
      %v416 = vsel %vm381, %v413, %v415
      %v417 = vrot.slane %v336, 1
      %v418 = vrot.slane %v337, 1
      %v419 = vsel %vm381, %v417, %v418
      %v420 = vrot.slane %v338, 1
      %v421 = vsel %vm381, %v418, %v420
      %v422 = vrot.slane %v339, 1
      %v423 = vrot.slane %v340, 1
      %v424 = vsel %vm381, %v422, %v423
      %v425 = vrot.slane %v341, 1
      %v426 = vsel %vm381, %v423, %v425
      %v427 = vrot.slane %v342, 1
      %v428 = vrot.slane %v343, 1
      %v429 = vsel %vm381, %v427, %v428
      %v430 = vrot.slane %v344, 1
      %v431 = vsel %vm381, %v428, %v430
      %432 = vrot.lane.b32.xlu0 %v384, 4
      %v433 = vpop.permute.xlu0 %432
      %434 = vrot.lane.b32.xlu0 %v386, 4
      %v435 = vpop.permute.xlu0 %434
      %436 = vrot.lane.b32.xlu0 %v389, 4
      %v437 = vpop.permute.xlu0 %436
      %438 = vrot.lane.b32.xlu0 %v391, 4
      %v439 = vpop.permute.xlu0 %438
      %440 = vrot.lane.b32.xlu0 %v394, 4
      %v441 = vpop.permute.xlu0 %440
      %442 = vrot.lane.b32.xlu0 %v396, 4
      %v443 = vpop.permute.xlu0 %442
      %444 = vrot.lane.b32.xlu0 %v399, 4
      %v445 = vpop.permute.xlu0 %444
      %446 = vrot.lane.b32.xlu0 %v401, 4
      %v447 = vpop.permute.xlu0 %446
      %448 = vrot.lane.b32.xlu0 %v404, 4
      %v449 = vpop.permute.xlu0 %448
      %450 = vrot.lane.b32.xlu0 %v406, 4
      %v451 = vpop.permute.xlu0 %450
      %452 = vrot.lane.b32.xlu0 %v409, 4
      %v453 = vpop.permute.xlu0 %452
      %454 = vrot.lane.b32.xlu0 %v411, 4
      %v455 = vpop.permute.xlu0 %454
      %456 = vrot.lane.b32.xlu0 %v414, 4
      %v457 = vpop.permute.xlu0 %456
      %458 = vrot.lane.b32.xlu0 %v416, 4
      %v459 = vpop.permute.xlu0 %458
      %460 = vrot.lane.b32.xlu0 %v419, 4
      %v461 = vpop.permute.xlu0 %460
      %462 = vrot.lane.b32.xlu0 %v421, 4
      %v463 = vpop.permute.xlu0 %462
      %464 = vrot.lane.b32.xlu0 %v424, 4
      %v465 = vpop.permute.xlu0 %464
      %466 = vrot.lane.b32.xlu0 %v426, 4
      %v467 = vpop.permute.xlu0 %466
      %468 = vrot.lane.b32.xlu0 %v429, 4
      %v469 = vpop.permute.xlu0 %468
      %470 = vrot.lane.b32.xlu0 %v431, 4
      %v471 = vpop.permute.xlu0 %470
      %vm492 = vcmask 1045504
      %v493 = vrot.slane %v315, 2
      %v494 = vrot.slane %v316, 2
      %v495 = vsel %vm492, %v493, %v494
      %v496 = vrot.slane %v317, 2
      %v497 = vsel %vm492, %v494, %v496
      %v498 = vrot.slane %v318, 2
      %v499 = vrot.slane %v319, 2
      %v500 = vsel %vm492, %v498, %v499
      %v501 = vrot.slane %v320, 2
      %v502 = vsel %vm492, %v499, %v501
      %v503 = vrot.slane %v321, 2
      %v504 = vrot.slane %v322, 2
      %v505 = vsel %vm492, %v503, %v504
      %v506 = vrot.slane %v323, 2
      %v507 = vsel %vm492, %v504, %v506
      %v508 = vrot.slane %v324, 2
      %v509 = vrot.slane %v325, 2
      %v510 = vsel %vm492, %v508, %v509
      %v511 = vrot.slane %v326, 2
      %v512 = vsel %vm492, %v509, %v511
      %v513 = vrot.slane %v327, 2
      %v514 = vrot.slane %v328, 2
      %v515 = vsel %vm492, %v513, %v514
      %v516 = vrot.slane %v329, 2
      %v517 = vsel %vm492, %v514, %v516
      %v518 = vrot.slane %v330, 2
      %v519 = vrot.slane %v331, 2
      %v520 = vsel %vm492, %v518, %v519
      %v521 = vrot.slane %v332, 2
      %v522 = vsel %vm492, %v519, %v521
      %v523 = vrot.slane %v333, 2
      %v524 = vrot.slane %v334, 2
      %v525 = vsel %vm492, %v523, %v524
      %v526 = vrot.slane %v335, 2
      %v527 = vsel %vm492, %v524, %v526
      %v528 = vrot.slane %v336, 2
      %v529 = vrot.slane %v337, 2
      %v530 = vsel %vm492, %v528, %v529
      %v531 = vrot.slane %v338, 2
      %v532 = vsel %vm492, %v529, %v531
      %v533 = vrot.slane %v339, 2
      %v534 = vrot.slane %v340, 2
      %v535 = vsel %vm492, %v533, %v534
      %v536 = vrot.slane %v341, 2
      %v537 = vsel %vm492, %v534, %v536
      %v538 = vrot.slane %v342, 2
      %v539 = vrot.slane %v343, 2
      %v540 = vsel %vm492, %v538, %v539
      %v541 = vrot.slane %v344, 2
      %v542 = vsel %vm492, %v539, %v541
      %543 = vrot.lane.b32.xlu0 %v495, 8
      %v544 = vpop.permute.xlu0 %543
      %545 = vrot.lane.b32.xlu0 %v497, 8
      %v546 = vpop.permute.xlu0 %545
      %547 = vrot.lane.b32.xlu0 %v500, 8
      %v548 = vpop.permute.xlu0 %547
      %549 = vrot.lane.b32.xlu0 %v502, 8
      %v550 = vpop.permute.xlu0 %549
      %551 = vrot.lane.b32.xlu0 %v505, 8
      %v552 = vpop.permute.xlu0 %551
      %553 = vrot.lane.b32.xlu0 %v507, 8
      %v554 = vpop.permute.xlu0 %553
      %555 = vrot.lane.b32.xlu0 %v510, 8
      %v556 = vpop.permute.xlu0 %555
      %557 = vrot.lane.b32.xlu0 %v512, 8
      %v558 = vpop.permute.xlu0 %557
      %559 = vrot.lane.b32.xlu0 %v515, 8
      %v560 = vpop.permute.xlu0 %559
      %561 = vrot.lane.b32.xlu0 %v517, 8
      %v562 = vpop.permute.xlu0 %561
      %563 = vrot.lane.b32.xlu0 %v520, 8
      %v564 = vpop.permute.xlu0 %563
      %565 = vrot.lane.b32.xlu0 %v522, 8
      %v566 = vpop.permute.xlu0 %565
      %567 = vrot.lane.b32.xlu0 %v525, 8
      %v568 = vpop.permute.xlu0 %567
      %569 = vrot.lane.b32.xlu0 %v527, 8
      %v570 = vpop.permute.xlu0 %569
      %571 = vrot.lane.b32.xlu0 %v530, 8
      %v572 = vpop.permute.xlu0 %571
      %573 = vrot.lane.b32.xlu0 %v532, 8
      %v574 = vpop.permute.xlu0 %573
      %575 = vrot.lane.b32.xlu0 %v535, 8
      %v576 = vpop.permute.xlu0 %575
      %577 = vrot.lane.b32.xlu0 %v537, 8
      %v578 = vpop.permute.xlu0 %577
      %579 = vrot.lane.b32.xlu0 %v540, 8
      %v580 = vpop.permute.xlu0 %579
      %581 = vrot.lane.b32.xlu0 %v542, 8
      %v582 = vpop.permute.xlu0 %581
      %605 = vrot.lane.b32.xlu0 %v318, 12
      %v606 = vpop.permute.xlu0 %605
      %607 = vrot.lane.b32.xlu0 %v319, 12
      %v608 = vpop.permute.xlu0 %607
      %609 = vrot.lane.b32.xlu0 %v321, 12
      %v610 = vpop.permute.xlu0 %609
      %611 = vrot.lane.b32.xlu0 %v322, 12
      %v612 = vpop.permute.xlu0 %611
      %613 = vrot.lane.b32.xlu0 %v324, 12
      %v614 = vpop.permute.xlu0 %613
      %615 = vrot.lane.b32.xlu0 %v325, 12
      %v616 = vpop.permute.xlu0 %615
      %617 = vrot.lane.b32.xlu0 %v327, 12
      %v618 = vpop.permute.xlu0 %617
      %619 = vrot.lane.b32.xlu0 %v328, 12
      %v620 = vpop.permute.xlu0 %619
      %621 = vrot.lane.b32.xlu0 %v330, 12
      %v622 = vpop.permute.xlu0 %621
      %623 = vrot.lane.b32.xlu0 %v331, 12
      %v624 = vpop.permute.xlu0 %623
      %625 = vrot.lane.b32.xlu0 %v333, 12
      %v626 = vpop.permute.xlu0 %625
      %627 = vrot.lane.b32.xlu0 %v334, 12
      %v628 = vpop.permute.xlu0 %627
      %629 = vrot.lane.b32.xlu0 %v336, 12
      %v630 = vpop.permute.xlu0 %629
      %631 = vrot.lane.b32.xlu0 %v337, 12
      %v632 = vpop.permute.xlu0 %631
      %633 = vrot.lane.b32.xlu0 %v339, 12
      %v634 = vpop.permute.xlu0 %633
      %635 = vrot.lane.b32.xlu0 %v340, 12
      %v636 = vpop.permute.xlu0 %635
      %637 = vrot.lane.b32.xlu0 %v342, 12
      %v638 = vpop.permute.xlu0 %637
      %639 = vrot.lane.b32.xlu0 %v343, 12
      %v640 = vpop.permute.xlu0 %639
      %641 = vrot.lane.b32.xlu0 %v345, 12
      %v642 = vpop.permute.xlu0 %641
      %643 = vrot.lane.b32.xlu0 %v346, 12
      %v644 = vpop.permute.xlu0 %643
      %v666 = vrot.slane %v345, 1
      %v667 = vrot.slane %v346, 1
      %v668 = vsel %vm381, %v666, %v667
      %v669 = vrot.slane %v347, 1
      %v670 = vsel %vm381, %v667, %v669
      %671 = vrot.lane.b32.xlu0 %v389, 16
      %v672 = vpop.permute.xlu0 %671
      %673 = vrot.lane.b32.xlu0 %v391, 16
      %v674 = vpop.permute.xlu0 %673
      %675 = vrot.lane.b32.xlu0 %v394, 16
      %v676 = vpop.permute.xlu0 %675
      %677 = vrot.lane.b32.xlu0 %v396, 16
      %v678 = vpop.permute.xlu0 %677
      %679 = vrot.lane.b32.xlu0 %v399, 16
      %v680 = vpop.permute.xlu0 %679
      %681 = vrot.lane.b32.xlu0 %v401, 16
      %v682 = vpop.permute.xlu0 %681
      %683 = vrot.lane.b32.xlu0 %v404, 16
      %v684 = vpop.permute.xlu0 %683
      %685 = vrot.lane.b32.xlu0 %v406, 16
      %v686 = vpop.permute.xlu0 %685
      %687 = vrot.lane.b32.xlu0 %v409, 16
      %v688 = vpop.permute.xlu0 %687
      %689 = vrot.lane.b32.xlu0 %v411, 16
      %v690 = vpop.permute.xlu0 %689
      %691 = vrot.lane.b32.xlu0 %v414, 16
      %v692 = vpop.permute.xlu0 %691
      %693 = vrot.lane.b32.xlu0 %v416, 16
      %v694 = vpop.permute.xlu0 %693
      %695 = vrot.lane.b32.xlu0 %v419, 16
      %v696 = vpop.permute.xlu0 %695
      %697 = vrot.lane.b32.xlu0 %v421, 16
      %v698 = vpop.permute.xlu0 %697
      %699 = vrot.lane.b32.xlu0 %v424, 16
      %v700 = vpop.permute.xlu0 %699
      %701 = vrot.lane.b32.xlu0 %v426, 16
      %v702 = vpop.permute.xlu0 %701
      %703 = vrot.lane.b32.xlu0 %v429, 16
      %v704 = vpop.permute.xlu0 %703
      %705 = vrot.lane.b32.xlu0 %v431, 16
      %v706 = vpop.permute.xlu0 %705
      %707 = vrot.lane.b32.xlu0 %v668, 16
      %v708 = vpop.permute.xlu0 %707
      %709 = vrot.lane.b32.xlu0 %v670, 16
      %v710 = vpop.permute.xlu0 %709
      %v731 = vrot.slane %v345, 2
      %v732 = vrot.slane %v346, 2
      %v733 = vsel %vm492, %v731, %v732
      %v734 = vrot.slane %v347, 2
      %v735 = vsel %vm492, %v732, %v734
      %736 = vrot.lane.b32.xlu0 %v500, 20
      %v737 = vpop.permute.xlu0 %736
      %738 = vrot.lane.b32.xlu0 %v502, 20
      %v739 = vpop.permute.xlu0 %738
      %740 = vrot.lane.b32.xlu0 %v505, 20
      %v741 = vpop.permute.xlu0 %740
      %742 = vrot.lane.b32.xlu0 %v507, 20
      %v743 = vpop.permute.xlu0 %742
      %744 = vrot.lane.b32.xlu0 %v510, 20
      %v745 = vpop.permute.xlu0 %744
      %746 = vrot.lane.b32.xlu0 %v512, 20
      %v747 = vpop.permute.xlu0 %746
      %748 = vrot.lane.b32.xlu0 %v515, 20
      %v749 = vpop.permute.xlu0 %748
      %750 = vrot.lane.b32.xlu0 %v517, 20
      %v751 = vpop.permute.xlu0 %750
      %752 = vrot.lane.b32.xlu0 %v520, 20
      %v753 = vpop.permute.xlu0 %752
      %754 = vrot.lane.b32.xlu0 %v522, 20
      %v755 = vpop.permute.xlu0 %754
      %756 = vrot.lane.b32.xlu0 %v525, 20
      %v757 = vpop.permute.xlu0 %756
      %758 = vrot.lane.b32.xlu0 %v527, 20
      %v759 = vpop.permute.xlu0 %758
      %760 = vrot.lane.b32.xlu0 %v530, 20
      %v761 = vpop.permute.xlu0 %760
      %762 = vrot.lane.b32.xlu0 %v532, 20
      %v763 = vpop.permute.xlu0 %762
      %764 = vrot.lane.b32.xlu0 %v535, 20
      %v765 = vpop.permute.xlu0 %764
      %766 = vrot.lane.b32.xlu0 %v537, 20
      %v767 = vpop.permute.xlu0 %766
      %768 = vrot.lane.b32.xlu0 %v540, 20
      %v769 = vpop.permute.xlu0 %768
      %770 = vrot.lane.b32.xlu0 %v542, 20
      %v771 = vpop.permute.xlu0 %770
      %772 = vrot.lane.b32.xlu0 %v733, 20
      %v773 = vpop.permute.xlu0 %772
      %774 = vrot.lane.b32.xlu0 %v735, 20
      %v775 = vpop.permute.xlu0 %774
      %798 = vrot.lane.b32.xlu0 %v321, 24
      %v799 = vpop.permute.xlu0 %798
      %800 = vrot.lane.b32.xlu0 %v322, 24
      %v801 = vpop.permute.xlu0 %800
      %802 = vrot.lane.b32.xlu0 %v324, 24
      %v803 = vpop.permute.xlu0 %802
      %804 = vrot.lane.b32.xlu0 %v325, 24
      %v805 = vpop.permute.xlu0 %804
      %806 = vrot.lane.b32.xlu0 %v327, 24
      %v807 = vpop.permute.xlu0 %806
      %808 = vrot.lane.b32.xlu0 %v328, 24
      %v809 = vpop.permute.xlu0 %808
      %810 = vrot.lane.b32.xlu0 %v330, 24
      %v811 = vpop.permute.xlu0 %810
      %812 = vrot.lane.b32.xlu0 %v331, 24
      %v813 = vpop.permute.xlu0 %812
      %814 = vrot.lane.b32.xlu0 %v333, 24
      %v815 = vpop.permute.xlu0 %814
      %816 = vrot.lane.b32.xlu0 %v334, 24
      %v817 = vpop.permute.xlu0 %816
      %818 = vrot.lane.b32.xlu0 %v336, 24
      %v819 = vpop.permute.xlu0 %818
      %820 = vrot.lane.b32.xlu0 %v337, 24
      %v821 = vpop.permute.xlu0 %820
      %822 = vrot.lane.b32.xlu0 %v339, 24
      %v823 = vpop.permute.xlu0 %822
      %824 = vrot.lane.b32.xlu0 %v340, 24
      %v825 = vpop.permute.xlu0 %824
      %826 = vrot.lane.b32.xlu0 %v342, 24
      %v827 = vpop.permute.xlu0 %826
      %828 = vrot.lane.b32.xlu0 %v343, 24
      %v829 = vpop.permute.xlu0 %828
      %830 = vrot.lane.b32.xlu0 %v345, 24
      %v831 = vpop.permute.xlu0 %830
      %832 = vrot.lane.b32.xlu0 %v346, 24
      %v833 = vpop.permute.xlu0 %832
      %834 = vrot.lane.b32.xlu0 %v348, 24
      %v835 = vpop.permute.xlu0 %834
      %836 = vrot.lane.b32.xlu0 %v349, 24
      %v837 = vpop.permute.xlu0 %836
      %v859 = vrot.slane %v348, 1
      %v860 = vrot.slane %v349, 1
      %v861 = vsel %vm381, %v859, %v860
      %v862 = vrot.slane %v350, 1
      %v863 = vsel %vm381, %v860, %v862
      %864 = vrot.lane.b32.xlu0 %v394, 28
      %v865 = vpop.permute.xlu0 %864
      %866 = vrot.lane.b32.xlu0 %v396, 28
      %v867 = vpop.permute.xlu0 %866
      %868 = vrot.lane.b32.xlu0 %v399, 28
      %v869 = vpop.permute.xlu0 %868
      %870 = vrot.lane.b32.xlu0 %v401, 28
      %v871 = vpop.permute.xlu0 %870
      %872 = vrot.lane.b32.xlu0 %v404, 28
      %v873 = vpop.permute.xlu0 %872
      %874 = vrot.lane.b32.xlu0 %v406, 28
      %v875 = vpop.permute.xlu0 %874
      %876 = vrot.lane.b32.xlu0 %v409, 28
      %v877 = vpop.permute.xlu0 %876
      %878 = vrot.lane.b32.xlu0 %v411, 28
      %v879 = vpop.permute.xlu0 %878
      %880 = vrot.lane.b32.xlu0 %v414, 28
      %v881 = vpop.permute.xlu0 %880
      %882 = vrot.lane.b32.xlu0 %v416, 28
      %v883 = vpop.permute.xlu0 %882
      %884 = vrot.lane.b32.xlu0 %v419, 28
      %v885 = vpop.permute.xlu0 %884
      %886 = vrot.lane.b32.xlu0 %v421, 28
      %v887 = vpop.permute.xlu0 %886
      %888 = vrot.lane.b32.xlu0 %v424, 28
      %v889 = vpop.permute.xlu0 %888
      %890 = vrot.lane.b32.xlu0 %v426, 28
      %v891 = vpop.permute.xlu0 %890
      %892 = vrot.lane.b32.xlu0 %v429, 28
      %v893 = vpop.permute.xlu0 %892
      %894 = vrot.lane.b32.xlu0 %v431, 28
      %v895 = vpop.permute.xlu0 %894
      %896 = vrot.lane.b32.xlu0 %v668, 28
      %v897 = vpop.permute.xlu0 %896
      %898 = vrot.lane.b32.xlu0 %v670, 28
      %v899 = vpop.permute.xlu0 %898
      %900 = vrot.lane.b32.xlu0 %v861, 28
      %v901 = vpop.permute.xlu0 %900
      %902 = vrot.lane.b32.xlu0 %v863, 28
      %v903 = vpop.permute.xlu0 %902
      %v924 = vrot.slane %v348, 2
      %v925 = vrot.slane %v349, 2
      %v926 = vsel %vm492, %v924, %v925
      %v927 = vrot.slane %v350, 2
      %v928 = vsel %vm492, %v925, %v927
      %929 = vrot.lane.b32.xlu0 %v505, 32
      %v930 = vpop.permute.xlu0 %929
      %931 = vrot.lane.b32.xlu0 %v507, 32
      %v932 = vpop.permute.xlu0 %931
      %933 = vrot.lane.b32.xlu0 %v510, 32
      %v934 = vpop.permute.xlu0 %933
      %935 = vrot.lane.b32.xlu0 %v512, 32
      %v936 = vpop.permute.xlu0 %935
      %937 = vrot.lane.b32.xlu0 %v515, 32
      %v938 = vpop.permute.xlu0 %937
      %939 = vrot.lane.b32.xlu0 %v517, 32
      %v940 = vpop.permute.xlu0 %939
      %941 = vrot.lane.b32.xlu0 %v520, 32
      %v942 = vpop.permute.xlu0 %941
      %943 = vrot.lane.b32.xlu0 %v522, 32
      %v944 = vpop.permute.xlu0 %943
      %945 = vrot.lane.b32.xlu0 %v525, 32
      %v946 = vpop.permute.xlu0 %945
      %947 = vrot.lane.b32.xlu0 %v527, 32
      %v948 = vpop.permute.xlu0 %947
      %949 = vrot.lane.b32.xlu0 %v530, 32
      %v950 = vpop.permute.xlu0 %949
      %951 = vrot.lane.b32.xlu0 %v532, 32
      %v952 = vpop.permute.xlu0 %951
      %953 = vrot.lane.b32.xlu0 %v535, 32
      %v954 = vpop.permute.xlu0 %953
      %955 = vrot.lane.b32.xlu0 %v537, 32
      %v956 = vpop.permute.xlu0 %955
      %957 = vrot.lane.b32.xlu0 %v540, 32
      %v958 = vpop.permute.xlu0 %957
      %959 = vrot.lane.b32.xlu0 %v542, 32
      %v960 = vpop.permute.xlu0 %959
      %961 = vrot.lane.b32.xlu0 %v733, 32
      %v962 = vpop.permute.xlu0 %961
      %963 = vrot.lane.b32.xlu0 %v735, 32
      %v964 = vpop.permute.xlu0 %963
      %965 = vrot.lane.b32.xlu0 %v926, 32
      %v966 = vpop.permute.xlu0 %965
      %967 = vrot.lane.b32.xlu0 %v928, 32
      %v968 = vpop.permute.xlu0 %967
      %vm989 = vcmask 31744
      %v990 = vsel %vm989, %v315, %v433
      %v991 = vsel %vm989, %v316, %v435
      %v992 = vsel %vm989, %v318, %v437
      %v993 = vsel %vm989, %v319, %v439
      %v994 = vsel %vm989, %v321, %v441
      %v995 = vsel %vm989, %v322, %v443
      %v996 = vsel %vm989, %v324, %v445
      %v997 = vsel %vm989, %v325, %v447
      %v998 = vsel %vm989, %v327, %v449
      %v999 = vsel %vm989, %v328, %v451
      %v1000 = vsel %vm989, %v330, %v453
      %v1001 = vsel %vm989, %v331, %v455
      %v1002 = vsel %vm989, %v333, %v457
      %v1003 = vsel %vm989, %v334, %v459
      %v1004 = vsel %vm989, %v336, %v461
      %v1005 = vsel %vm989, %v337, %v463
      %v1006 = vsel %vm989, %v339, %v465
      %v1007 = vsel %vm989, %v340, %v467
      %v1008 = vsel %vm989, %v342, %v469
      %v1009 = vsel %vm989, %v343, %v471
      %vm1010 = vcmask 64512
      %v1011 = vsel %vm1010, %v990, %v544
      %v1012 = vsel %vm1010, %v991, %v546
      %v1013 = vsel %vm1010, %v992, %v548
      %v1014 = vsel %vm1010, %v993, %v550
      %v1015 = vsel %vm1010, %v994, %v552
      %v1016 = vsel %vm1010, %v995, %v554
      %v1017 = vsel %vm1010, %v996, %v556
      %v1018 = vsel %vm1010, %v997, %v558
      %v1019 = vsel %vm1010, %v998, %v560
      %v1020 = vsel %vm1010, %v999, %v562
      %v1021 = vsel %vm1010, %v1000, %v564
      %v1022 = vsel %vm1010, %v1001, %v566
      %v1023 = vsel %vm1010, %v1002, %v568
      %v1024 = vsel %vm1010, %v1003, %v570
      %v1025 = vsel %vm1010, %v1004, %v572
      %v1026 = vsel %vm1010, %v1005, %v574
      %v1027 = vsel %vm1010, %v1006, %v576
      %v1028 = vsel %vm1010, %v1007, %v578
      %v1029 = vsel %vm1010, %v1008, %v580
      %v1030 = vsel %vm1010, %v1009, %v582
      %vm1031 = vcmask 97280
      %v1032 = vsel %vm1031, %v1011, %v606
      %v1033 = vsel %vm1031, %v1012, %v608
      %v1034 = vsel %vm1031, %v1013, %v610
      %v1035 = vsel %vm1031, %v1014, %v612
      %v1036 = vsel %vm1031, %v1015, %v614
      %v1037 = vsel %vm1031, %v1016, %v616
      %v1038 = vsel %vm1031, %v1017, %v618
      %v1039 = vsel %vm1031, %v1018, %v620
      %v1040 = vsel %vm1031, %v1019, %v622
      %v1041 = vsel %vm1031, %v1020, %v624
      %v1042 = vsel %vm1031, %v1021, %v626
      %v1043 = vsel %vm1031, %v1022, %v628
      %v1044 = vsel %vm1031, %v1023, %v630
      %v1045 = vsel %vm1031, %v1024, %v632
      %v1046 = vsel %vm1031, %v1025, %v634
      %v1047 = vsel %vm1031, %v1026, %v636
      %v1048 = vsel %vm1031, %v1027, %v638
      %v1049 = vsel %vm1031, %v1028, %v640
      %v1050 = vsel %vm1031, %v1029, %v642
      %v1051 = vsel %vm1031, %v1030, %v644
      %vm1052 = vcmask 130048
      %v1053 = vsel %vm1052, %v1032, %v672
      %v1054 = vsel %vm1052, %v1033, %v674
      %v1055 = vsel %vm1052, %v1034, %v676
      %v1056 = vsel %vm1052, %v1035, %v678
      %v1057 = vsel %vm1052, %v1036, %v680
      %v1058 = vsel %vm1052, %v1037, %v682
      %v1059 = vsel %vm1052, %v1038, %v684
      %v1060 = vsel %vm1052, %v1039, %v686
      %v1061 = vsel %vm1052, %v1040, %v688
      %v1062 = vsel %vm1052, %v1041, %v690
      %v1063 = vsel %vm1052, %v1042, %v692
      %v1064 = vsel %vm1052, %v1043, %v694
      %v1065 = vsel %vm1052, %v1044, %v696
      %v1066 = vsel %vm1052, %v1045, %v698
      %v1067 = vsel %vm1052, %v1046, %v700
      %v1068 = vsel %vm1052, %v1047, %v702
      %v1069 = vsel %vm1052, %v1048, %v704
      %v1070 = vsel %vm1052, %v1049, %v706
      %v1071 = vsel %vm1052, %v1050, %v708
      %v1072 = vsel %vm1052, %v1051, %v710
      %vm1073 = vcmask 162816
      %v1074 = vsel %vm1073, %v1053, %v737
      %v1075 = vsel %vm1073, %v1054, %v739
      %v1076 = vsel %vm1073, %v1055, %v741
      %v1077 = vsel %vm1073, %v1056, %v743
      %v1078 = vsel %vm1073, %v1057, %v745
      %v1079 = vsel %vm1073, %v1058, %v747
      %v1080 = vsel %vm1073, %v1059, %v749
      %v1081 = vsel %vm1073, %v1060, %v751
      %v1082 = vsel %vm1073, %v1061, %v753
      %v1083 = vsel %vm1073, %v1062, %v755
      %v1084 = vsel %vm1073, %v1063, %v757
      %v1085 = vsel %vm1073, %v1064, %v759
      %v1086 = vsel %vm1073, %v1065, %v761
      %v1087 = vsel %vm1073, %v1066, %v763
      %v1088 = vsel %vm1073, %v1067, %v765
      %v1089 = vsel %vm1073, %v1068, %v767
      %v1090 = vsel %vm1073, %v1069, %v769
      %v1091 = vsel %vm1073, %v1070, %v771
      %v1092 = vsel %vm1073, %v1071, %v773
      %v1093 = vsel %vm1073, %v1072, %v775
      %vm1094 = vcmask 195584
      %v1095 = vsel %vm1094, %v1074, %v799
      %v1096 = vsel %vm1094, %v1075, %v801
      %v1097 = vsel %vm1094, %v1076, %v803
      %v1098 = vsel %vm1094, %v1077, %v805
      %v1099 = vsel %vm1094, %v1078, %v807
      %v1100 = vsel %vm1094, %v1079, %v809
      %v1101 = vsel %vm1094, %v1080, %v811
      %v1102 = vsel %vm1094, %v1081, %v813
      %v1103 = vsel %vm1094, %v1082, %v815
      %v1104 = vsel %vm1094, %v1083, %v817
      %v1105 = vsel %vm1094, %v1084, %v819
      %v1106 = vsel %vm1094, %v1085, %v821
      %v1107 = vsel %vm1094, %v1086, %v823
      %v1108 = vsel %vm1094, %v1087, %v825
      %v1109 = vsel %vm1094, %v1088, %v827
      %v1110 = vsel %vm1094, %v1089, %v829
      %v1111 = vsel %vm1094, %v1090, %v831
      %v1112 = vsel %vm1094, %v1091, %v833
      %v1113 = vsel %vm1094, %v1092, %v835
      %v1114 = vsel %vm1094, %v1093, %v837
      %vm1115 = vcmask 228352
      %v1116 = vsel %vm1115, %v1095, %v865
      %v1117 = vsel %vm1115, %v1096, %v867
      %v1118 = vsel %vm1115, %v1097, %v869
      %v1119 = vsel %vm1115, %v1098, %v871
      %v1120 = vsel %vm1115, %v1099, %v873
      %v1121 = vsel %vm1115, %v1100, %v875
      %v1122 = vsel %vm1115, %v1101, %v877
      %v1123 = vsel %vm1115, %v1102, %v879
      %v1124 = vsel %vm1115, %v1103, %v881
      %v1125 = vsel %vm1115, %v1104, %v883
      %v1126 = vsel %vm1115, %v1105, %v885
      %v1127 = vsel %vm1115, %v1106, %v887
      %v1128 = vsel %vm1115, %v1107, %v889
      %v1129 = vsel %vm1115, %v1108, %v891
      %v1130 = vsel %vm1115, %v1109, %v893
      %v1131 = vsel %vm1115, %v1110, %v895
      %v1132 = vsel %vm1115, %v1111, %v897
      %v1133 = vsel %vm1115, %v1112, %v899
      %v1134 = vsel %vm1115, %v1113, %v901
      %v1135 = vsel %vm1115, %v1114, %v903
      %vm1136 = vcmask 261120
      %v1137 = vsel %vm1136, %v1116, %v930
      %v1138 = vsel %vm1136, %v1117, %v932
      %v1139 = vsel %vm1136, %v1118, %v934
      %v1140 = vsel %vm1136, %v1119, %v936
      %v1141 = vsel %vm1136, %v1120, %v938
      %v1142 = vsel %vm1136, %v1121, %v940
      %v1143 = vsel %vm1136, %v1122, %v942
      %v1144 = vsel %vm1136, %v1123, %v944
      %v1145 = vsel %vm1136, %v1124, %v946
      %v1146 = vsel %vm1136, %v1125, %v948
      %v1147 = vsel %vm1136, %v1126, %v950
      %v1148 = vsel %vm1136, %v1127, %v952
      %v1149 = vsel %vm1136, %v1128, %v954
      %v1150 = vsel %vm1136, %v1129, %v956
      %v1151 = vsel %vm1136, %v1130, %v958
      %v1152 = vsel %vm1136, %v1131, %v960
      %v1153 = vsel %vm1136, %v1132, %v962
      %v1154 = vsel %vm1136, %v1133, %v964
      %v1155 = vsel %vm1136, %v1134, %v966
      %v1156 = vsel %vm1136, %v1135, %v968
      %v1157 = vld [vmem:[%s1] sm:$0xff]
      %v1158 = vld [vmem:[%s1 + $0x8] sm:$0xff]
      %v1159 = vld [vmem:[%s1 + $0x10] sm:$0xff]
      %v1160 = vld [vmem:[%s1 + $0x18] sm:$0xff]
      %v1161 = vld [vmem:[%s1 + $0x20] sm:$0xf]
      %vm1162 = vcmask 293888
      %v1164 = vsel %vm1162, %v1137, 0
      %v1167 = vsel %vm1162, %v1138, 0
      %v1170 = vsel %vm1162, %v1139, 0
      %v1173 = vsel %vm1162, %v1140, 0
      %v1176 = vsel %vm1162, %v1141, 0
      %v1179 = vsel %vm1162, %v1142, 0
      %v1182 = vsel %vm1162, %v1143, 0
      %v1185 = vsel %vm1162, %v1144, 0
      %v1188 = vsel %vm1162, %v1145, 0
      %v1191 = vsel %vm1162, %v1146, 0
      %v1194 = vsel %vm1162, %v1147, 0
      %v1197 = vsel %vm1162, %v1148, 0
      %v1200 = vsel %vm1162, %v1149, 0
      %v1203 = vsel %vm1162, %v1150, 0
      %v1206 = vsel %vm1162, %v1151, 0
      %v1209 = vsel %vm1162, %v1152, 0
      %v1212 = vsel %vm1162, %v1153, 0
      %v1215 = vsel %vm1162, %v1154, 0
      %v1218 = vsel %vm1162, %v1155, 0
      %v1221 = vsel %vm1162, %v1156, 0
      %vm1223 = vcmask 1043456
      %v1225 = vsel %vm1223, %v1161, 0
      %1227 = vmatprep.subr.mxu0 0.0
      %1228 = vmatpush1.msra.mxu0 0.0
      %1229 = vmatprep.subr.mxu0 0.0
      %1230 = vmatpush1.msra.mxu0 0.0
      %1231 = vmatprep.subr.mxu0 0.0
      %1232 = vmatpush1.msra.mxu0 0.0
      %1233 = vmatprep.subr.mxu0 0.0
      %1234 = vmatpush1.msra.mxu0 0.0
      %1235 = vmatprep.subr.mxu0 0.0
      %1236 = vmatpush1.msra.mxu0 0.0
      %1237 = vmatprep.subr.mxu0 0.0
      %1238 = vmatpush1.msra.mxu0 0.0
      %1239 = vmatprep.subr.mxu0 0.0
      %1240 = vmatpush1.msra.mxu0 0.0
      %1241 = vmatprep.subr.mxu0 0.0
      %1242 = vmatpush1.msra.mxu0 0.0
      %1243 = vmatprep.subr.mxu0 0.0
      %1244 = vmatpush1.msra.mxu0 0.0
      %1245 = vmatprep.subr.mxu0 0.0
      %1246 = vmatpush1.msra.mxu0 0.0
      %1247 = vmatprep.subr.mxu0 0.0
      %1248 = vmatpush1.msra.mxu0 0.0
      %1249 = vmatprep.subr.mxu0 0.0
      %1250 = vmatpush1.msra.mxu0 %v1225
      %1251 = vmatprep.subr.mxu0 0.0
      %1252 = vmatpush1.msra.mxu0 %v1160
      %1253 = vmatprep.subr.mxu0 0.0
      %1254 = vmatpush1.msra.mxu0 %v1159
      %1255 = vmatprep.subr.mxu0 0.0
      %1256 = vmatpush1.msra.mxu0 %v1158
      %1257 = vmatprep.subr.mxu0 0.0
      %1258 = vmatpush1.msra.mxu0 %v1157
      %1259 = vmatprep.subr.mxu0 0.0
      %1260 = vmatpush2.msra.mxu0 0.0
      %1261 = vmatprep.subr.mxu0 0.0
      %1262 = vmatpush2.msra.mxu0 0.0
      %1263 = vmatprep.subr.mxu0 0.0
      %1264 = vmatpush2.msra.mxu0 0.0
      %1265 = vmatprep.subr.mxu0 0.0
      %1266 = vmatpush2.msra.mxu0 0.0
      %1267 = vmatprep.subr.mxu0 0.0
      %1268 = vmatpush2.msra.mxu0 0.0
      %1269 = vmatprep.subr.mxu0 0.0
      %1270 = vmatpush2.msra.mxu0 0.0
      %1271 = vmatprep.subr.mxu0 0.0
      %1272 = vmatpush2.msra.mxu0 0.0
      %1273 = vmatprep.subr.mxu0 0.0
      %1274 = vmatpush2.msra.mxu0 0.0
      %1275 = vmatprep.subr.mxu0 0.0
      %1276 = vmatpush2.msra.mxu0 0.0
      %1277 = vmatprep.subr.mxu0 0.0
      %1278 = vmatpush2.msra.mxu0 0.0
      %1279 = vmatprep.subr.mxu0 0.0
      %1280 = vmatpush2.msra.mxu0 0.0
      %1281 = vmatprep.subr.mxu0 0.0
      %1282 = vmatpush2.msra.mxu0 0.0
      %1283 = vmatprep.subr.mxu0 0.0
      %1284 = vmatpush2.msra.mxu0 0.0
      %1285 = vmatprep.subr.mxu0 0.0
      %1286 = vmatpush2.msra.mxu0 0.0
      %1287 = vmatprep.subr.mxu0 0.0
      %1288 = vmatpush2.msra.mxu0 0.0
      %1289 = vmatprep.subr.mxu0 0.0
      %1290 = vmatpush2.msra.mxu0 0.0
      %1291 = vmatprep.mubr.f32.mxu0 0.0
      %1292 = vmatmul.mubr.f32.gmra.mxu0 %v1164
      %v1293 = vpop.f32.mrf.mxu0
      %v1294 = vadd.f32 0.0, %v1293
      %v1295 = vpop.f32.mrf.mxu0
      %1296 = vmatprep.mubr.f32.mxu0 0.0
      %1297 = vmatmul.mubr.f32.gmra.mxu0 %v1167
      %v1298 = vpop.f32.mrf.mxu0
      %v1299 = vadd.f32 0.0, %v1298
      %v1300 = vpop.f32.mrf.mxu0
      %1301 = vmatprep.mubr.f32.mxu0 0.0
      %1302 = vmatmul.mubr.f32.gmra.mxu0 %v1170
      %v1303 = vpop.f32.mrf.mxu0
      %v1304 = vadd.f32 0.0, %v1303
      %v1305 = vpop.f32.mrf.mxu0
      %1306 = vmatprep.mubr.f32.mxu0 0.0
      %1307 = vmatmul.mubr.f32.gmra.mxu0 %v1173
      %v1308 = vpop.f32.mrf.mxu0
      %v1309 = vadd.f32 0.0, %v1308
      %v1310 = vpop.f32.mrf.mxu0
      %1311 = vmatprep.mubr.f32.mxu0 0.0
      %1312 = vmatmul.mubr.f32.gmra.mxu0 %v1176
      %v1313 = vpop.f32.mrf.mxu0
      %v1314 = vadd.f32 0.0, %v1313
      %v1315 = vpop.f32.mrf.mxu0
      %1316 = vmatprep.mubr.f32.mxu0 0.0
      %1317 = vmatmul.mubr.f32.gmra.mxu0 %v1179
      %v1318 = vpop.f32.mrf.mxu0
      %v1319 = vadd.f32 0.0, %v1318
      %v1320 = vpop.f32.mrf.mxu0
      %1321 = vmatprep.mubr.f32.mxu0 0.0
      %1322 = vmatmul.mubr.f32.gmra.mxu0 %v1182
      %v1323 = vpop.f32.mrf.mxu0
      %v1324 = vadd.f32 0.0, %v1323
      %v1325 = vpop.f32.mrf.mxu0
      %1326 = vmatprep.mubr.f32.mxu0 0.0
      %1327 = vmatmul.mubr.f32.gmra.mxu0 %v1185
      %v1328 = vpop.f32.mrf.mxu0
      %v1329 = vadd.f32 0.0, %v1328
      %v1330 = vpop.f32.mrf.mxu0
      %1331 = vmatprep.mubr.f32.mxu0 0.0
      %1332 = vmatmul.mubr.f32.gmra.mxu0 %v1188
      %v1333 = vpop.f32.mrf.mxu0
      %v1334 = vadd.f32 0.0, %v1333
      %v1335 = vpop.f32.mrf.mxu0
      %1336 = vmatprep.mubr.f32.mxu0 0.0
      %1337 = vmatmul.mubr.f32.gmra.mxu0 %v1191
      %v1338 = vpop.f32.mrf.mxu0
      %v1339 = vadd.f32 0.0, %v1338
      %v1340 = vpop.f32.mrf.mxu0
      %1341 = vmatprep.mubr.f32.mxu0 0.0
      %1342 = vmatmul.mubr.f32.gmra.mxu0 %v1194
      %v1343 = vpop.f32.mrf.mxu0
      %v1344 = vadd.f32 0.0, %v1343
      %v1345 = vpop.f32.mrf.mxu0
      %1346 = vmatprep.mubr.f32.mxu0 0.0
      %1347 = vmatmul.mubr.f32.gmra.mxu0 %v1197
      %v1348 = vpop.f32.mrf.mxu0
      %v1349 = vadd.f32 0.0, %v1348
      %v1350 = vpop.f32.mrf.mxu0
      %1351 = vmatprep.mubr.f32.mxu0 0.0
      %1352 = vmatmul.mubr.f32.gmra.mxu0 %v1200
      %v1353 = vpop.f32.mrf.mxu0
      %v1354 = vadd.f32 0.0, %v1353
      %v1355 = vpop.f32.mrf.mxu0
      %1356 = vmatprep.mubr.f32.mxu0 0.0
      %1357 = vmatmul.mubr.f32.gmra.mxu0 %v1203
      %v1358 = vpop.f32.mrf.mxu0
      %v1359 = vadd.f32 0.0, %v1358
      %v1360 = vpop.f32.mrf.mxu0
      %1361 = vmatprep.mubr.f32.mxu0 0.0
      %1362 = vmatmul.mubr.f32.gmra.mxu0 %v1206
      %v1363 = vpop.f32.mrf.mxu0
      %v1364 = vadd.f32 0.0, %v1363
      %v1365 = vpop.f32.mrf.mxu0
      %1366 = vmatprep.mubr.f32.mxu0 0.0
      %1367 = vmatmul.mubr.f32.gmra.mxu0 %v1209
      %v1368 = vpop.f32.mrf.mxu0
      %v1369 = vadd.f32 0.0, %v1368
      %v1370 = vpop.f32.mrf.mxu0
      %1371 = vmatprep.mubr.f32.mxu0 0.0
      %1372 = vmatmul.mubr.f32.gmra.mxu0 %v1212
      %v1373 = vpop.f32.mrf.mxu0
      %v1374 = vadd.f32 0.0, %v1373
      %v1375 = vpop.f32.mrf.mxu0
      %1376 = vmatprep.mubr.f32.mxu0 0.0
      %1377 = vmatmul.mubr.f32.gmra.mxu0 %v1215
      %v1378 = vpop.f32.mrf.mxu0
      %v1379 = vadd.f32 0.0, %v1378
      %v1380 = vpop.f32.mrf.mxu0
      %1381 = vmatprep.mubr.f32.mxu0 0.0
      %1382 = vmatmul.mubr.f32.gmra.mxu0 %v1218
      %v1383 = vpop.f32.mrf.mxu0
      %v1384 = vadd.f32 0.0, %v1383
      %v1385 = vpop.f32.mrf.mxu0
      %1386 = vmatprep.mubr.f32.mxu0 0.0
      %1387 = vmatmul.mubr.f32.gmra.mxu0 %v1221
      %v1388 = vpop.f32.mrf.mxu0
      %v1389 = vadd.f32 0.0, %v1388
      %v1390 = vpop.f32.mrf.mxu0
      %1391 = vdwg.mxu0
      %v1392 = vld [vmem:[%s2] sm:$0x1]
      %v1394 = vlaneseq
      %v1395 = vshrl.u32 %v1394, 7
      %v1396 = vsub.s32 0, %v1395
      %v1397 = vrot.slane %v1392, %v1396
      %v1399 = vmul.f32 %v1294, %v1397
      %v1400 = vmul.f32 %v1299, %v1397
      %v1401 = vmul.f32 %v1304, %v1397
      %v1402 = vmul.f32 %v1309, %v1397
      %v1403 = vmul.f32 %v1314, %v1397
      %v1404 = vmul.f32 %v1319, %v1397
      %v1405 = vmul.f32 %v1324, %v1397
      %v1406 = vmul.f32 %v1329, %v1397
      %v1407 = vmul.f32 %v1334, %v1397
      %v1408 = vmul.f32 %v1339, %v1397
      %v1409 = vmul.f32 %v1344, %v1397
      %v1410 = vmul.f32 %v1349, %v1397
      %v1411 = vmul.f32 %v1354, %v1397
      %v1412 = vmul.f32 %v1359, %v1397
      %v1413 = vmul.f32 %v1364, %v1397
      %v1414 = vmul.f32 %v1369, %v1397
      %v1415 = vmul.f32 %v1374, %v1397
      %v1416 = vmul.f32 %v1379, %v1397
      %v1417 = vmul.f32 %v1384, %v1397
      %v1418 = vmul.f32 %v1389, %v1397
      %v1419 = vld [vmem:[%s3] sm:$0x1]
      %v1421 = vlaneseq
      %v1422 = vshrl.u32 %v1421, 7
      %v1423 = vsub.s32 0, %v1422
      %v1424 = vrot.slane %v1419, %v1423
      %v1426 = vadd.f32 %v1399, %v1424
      %v1427 = vadd.f32 %v1400, %v1424
      %v1428 = vadd.f32 %v1401, %v1424
      %v1429 = vadd.f32 %v1402, %v1424
      %v1430 = vadd.f32 %v1403, %v1424
      %v1431 = vadd.f32 %v1404, %v1424
      %v1432 = vadd.f32 %v1405, %v1424
      %v1433 = vadd.f32 %v1406, %v1424
      %v1434 = vadd.f32 %v1407, %v1424
      %v1435 = vadd.f32 %v1408, %v1424
      %v1436 = vadd.f32 %v1409, %v1424
      %v1437 = vadd.f32 %v1410, %v1424
      %v1438 = vadd.f32 %v1411, %v1424
      %v1439 = vadd.f32 %v1412, %v1424
      %v1440 = vadd.f32 %v1413, %v1424
      %v1441 = vadd.f32 %v1414, %v1424
      %v1442 = vadd.f32 %v1415, %v1424
      %v1443 = vadd.f32 %v1416, %v1424
      %v1444 = vadd.f32 %v1417, %v1424
      %v1445 = vadd.f32 %v1418, %v1424
      %vm1446 = vcmp.ge.f32.partialorder %v1426, 0.0
      %vm1447 = vcmp.ge.f32.partialorder %v1427, 0.0
      %vm1448 = vcmp.ge.f32.partialorder %v1428, 0.0
      %vm1449 = vcmp.ge.f32.partialorder %v1429, 0.0
      %vm1450 = vcmp.ge.f32.partialorder %v1430, 0.0
      %vm1451 = vcmp.ge.f32.partialorder %v1431, 0.0
      %vm1452 = vcmp.ge.f32.partialorder %v1432, 0.0
      %vm1453 = vcmp.ge.f32.partialorder %v1433, 0.0
      %vm1454 = vcmp.ge.f32.partialorder %v1434, 0.0
      %vm1455 = vcmp.ge.f32.partialorder %v1435, 0.0
      %vm1456 = vcmp.ge.f32.partialorder %v1436, 0.0
      %vm1457 = vcmp.ge.f32.partialorder %v1437, 0.0
      %vm1458 = vcmp.ge.f32.partialorder %v1438, 0.0
      %vm1459 = vcmp.ge.f32.partialorder %v1439, 0.0
      %vm1460 = vcmp.ge.f32.partialorder %v1440, 0.0
      %vm1461 = vcmp.ge.f32.partialorder %v1441, 0.0
      %vm1462 = vcmp.ge.f32.partialorder %v1442, 0.0
      %vm1463 = vcmp.ge.f32.partialorder %v1443, 0.0
      %vm1464 = vcmp.ge.f32.partialorder %v1444, 0.0
      %vm1465 = vcmp.ge.f32.partialorder %v1445, 0.0
      %v1466 = vmul.f32 %v1426, 0.1
      %v1467 = vmul.f32 %v1427, 0.1
      %v1468 = vmul.f32 %v1428, 0.1
      %v1469 = vmul.f32 %v1429, 0.1
      %v1470 = vmul.f32 %v1430, 0.1
      %v1471 = vmul.f32 %v1431, 0.1
      %v1472 = vmul.f32 %v1432, 0.1
      %v1473 = vmul.f32 %v1433, 0.1
      %v1474 = vmul.f32 %v1434, 0.1
      %v1475 = vmul.f32 %v1435, 0.1
      %v1476 = vmul.f32 %v1436, 0.1
      %v1477 = vmul.f32 %v1437, 0.1
      %v1478 = vmul.f32 %v1438, 0.1
      %v1479 = vmul.f32 %v1439, 0.1
      %v1480 = vmul.f32 %v1440, 0.1
      %v1481 = vmul.f32 %v1441, 0.1
      %v1482 = vmul.f32 %v1442, 0.1
      %v1483 = vmul.f32 %v1443, 0.1
      %v1484 = vmul.f32 %v1444, 0.1
      %v1485 = vmul.f32 %v1445, 0.1
      %v1486 = vsel %vm1446, %v1426, %v1466
      %v1487 = vsel %vm1447, %v1427, %v1467
      %v1488 = vsel %vm1448, %v1428, %v1468
      %v1489 = vsel %vm1449, %v1429, %v1469
      %v1490 = vsel %vm1450, %v1430, %v1470
      %v1491 = vsel %vm1451, %v1431, %v1471
      %v1492 = vsel %vm1452, %v1432, %v1472
      %v1493 = vsel %vm1453, %v1433, %v1473
      %v1494 = vsel %vm1454, %v1434, %v1474
      %v1495 = vsel %vm1455, %v1435, %v1475
      %v1496 = vsel %vm1456, %v1436, %v1476
      %v1497 = vsel %vm1457, %v1437, %v1477
      %v1498 = vsel %vm1458, %v1438, %v1478
      %v1499 = vsel %vm1459, %v1439, %v1479
      %v1500 = vsel %vm1460, %v1440, %v1480
      %v1501 = vsel %vm1461, %v1441, %v1481
      %v1502 = vsel %vm1462, %v1442, %v1482
      %v1503 = vsel %vm1463, %v1443, %v1483
      %v1504 = vsel %vm1464, %v1444, %v1484
      %v1505 = vsel %vm1465, %v1445, %v1485
      %p1506 = scmp.gt.s32.totalorder %s23, 0
      %s1507 = scalar_select %p1506, 1, 0
      %v1508 = vstv %s1507
      %vm1509 = vcmp.eq.s32.totalorder %v1508, 1
      %p1510 = scmp.lt.s32.totalorder %s23, 1
      %s1511 = scalar_select %p1510, 1, 0
      %v1512 = vstv %s1511
      %vm1513 = vcmp.eq.s32.totalorder %v1512, 1
      %v1514 = vsel %vm1509, 1, 0
      %v1515 = vsel %vm1513, 1, 0
      %vm1516 = vcmp.eq.s32.totalorder %v1514, 1
      %vm1517 = vcmp.eq.s32.totalorder %v1515, 1
      %v1518 = vsel %vm1516, %v1486, 0.0
      %v1519 = vsel %vm1516, %v1487, 0.0
      %v1520 = vsel 1, %v1488, 0.0
      %v1521 = vsel 1, %v1489, 0.0
      %v1522 = vsel 1, %v1490, 0.0
      %v1523 = vsel 1, %v1491, 0.0
      %v1524 = vsel 1, %v1492, 0.0
      %v1525 = vsel 1, %v1493, 0.0
      %v1526 = vsel 1, %v1494, 0.0
      %v1527 = vsel 1, %v1495, 0.0
      %v1528 = vsel 1, %v1496, 0.0
      %v1529 = vsel 1, %v1497, 0.0
      %v1530 = vsel 1, %v1498, 0.0
      %v1531 = vsel 1, %v1499, 0.0
      %v1532 = vsel 1, %v1500, 0.0
      %v1533 = vsel 1, %v1501, 0.0
      %v1534 = vsel 1, %v1502, 0.0
      %v1535 = vsel 1, %v1503, 0.0
      %v1536 = vsel %vm1517, %v1504, 0.0
      %v1537 = vsel %vm1517, %v1505, 0.0
      %vm1558 = vcmask 1040384
      %v1559 = vrot.slane %v1518, 7
      %v1560 = vrot.slane %v1519, 7
      %v1561 = vsel %vm1558, %v1559, %v1560
      %v1562 = vrot.slane %v1520, 7
      %v1563 = vrot.slane %v1521, 7
      %v1564 = vsel %vm1558, %v1562, %v1563
      %v1565 = vrot.slane %v1522, 7
      %v1566 = vrot.slane %v1523, 7
      %v1567 = vsel %vm1558, %v1565, %v1566
      %v1568 = vrot.slane %v1524, 7
      %v1569 = vrot.slane %v1525, 7
      %v1570 = vsel %vm1558, %v1568, %v1569
      %v1571 = vrot.slane %v1526, 7
      %v1572 = vrot.slane %v1527, 7
      %v1573 = vsel %vm1558, %v1571, %v1572
      %v1574 = vrot.slane %v1528, 7
      %v1575 = vrot.slane %v1529, 7
      %v1576 = vsel %vm1558, %v1574, %v1575
      %v1577 = vrot.slane %v1530, 7
      %v1578 = vrot.slane %v1531, 7
      %v1579 = vsel %vm1558, %v1577, %v1578
      %v1580 = vrot.slane %v1532, 7
      %v1581 = vrot.slane %v1533, 7
      %v1582 = vsel %vm1558, %v1580, %v1581
      %v1583 = vrot.slane %v1534, 7
      %v1584 = vrot.slane %v1535, 7
      %v1585 = vsel %vm1558, %v1583, %v1584
      %v1586 = vrot.slane %v1536, 7
      %v1587 = vrot.slane %v1537, 7
      %v1588 = vsel %vm1558, %v1586, %v1587
      %v1617 = vsel %vm1558, 0.0, %v1559
      %v1618 = vsel %vm1558, 0.0, %v1562
      %v1619 = vsel %vm1558, 0.0, %v1565
      %v1620 = vsel %vm1558, 0.0, %v1568
      %v1621 = vsel %vm1558, 0.0, %v1571
      %v1622 = vsel %vm1558, 0.0, %v1574
      %v1623 = vsel %vm1558, 0.0, %v1577
      %v1624 = vsel %vm1558, 0.0, %v1580
      %v1625 = vsel %vm1558, 0.0, %v1583
      %v1626 = vsel %vm1558, 0.0, %v1586
      %v1627 = vsel %vm1558, %v1560, 0.0
      %v1628 = vsel %vm1558, %v1563, 0.0
      %v1629 = vsel %vm1558, %v1566, 0.0
      %v1630 = vsel %vm1558, %v1569, 0.0
      %v1631 = vsel %vm1558, %v1572, 0.0
      %v1632 = vsel %vm1558, %v1575, 0.0
      %v1633 = vsel %vm1558, %v1578, 0.0
      %v1634 = vsel %vm1558, %v1581, 0.0
      %v1635 = vsel %vm1558, %v1584, 0.0
      %v1636 = vsel %vm1558, %v1587, 0.0
      %v1653 = vrot.slane %v1617, 1
      %v1654 = vrot.slane %v1561, 1
      %v1655 = vsel %vm381, %v1653, %v1654
      %v1656 = vrot.slane %v1627, 1
      %v1657 = vsel %vm381, %v1654, %v1656
      %v1658 = vrot.slane %v1618, 1
      %v1659 = vrot.slane %v1564, 1
      %v1660 = vsel %vm381, %v1658, %v1659
      %v1661 = vrot.slane %v1628, 1
      %v1662 = vsel %vm381, %v1659, %v1661
      %v1663 = vrot.slane %v1619, 1
      %v1664 = vrot.slane %v1567, 1
      %v1665 = vsel %vm381, %v1663, %v1664
      %v1666 = vrot.slane %v1629, 1
      %v1667 = vsel %vm381, %v1664, %v1666
      %v1668 = vrot.slane %v1620, 1
      %v1669 = vrot.slane %v1570, 1
      %v1670 = vsel %vm381, %v1668, %v1669
      %v1671 = vrot.slane %v1630, 1
      %v1672 = vsel %vm381, %v1669, %v1671
      %v1673 = vrot.slane %v1621, 1
      %v1674 = vrot.slane %v1573, 1
      %v1675 = vsel %vm381, %v1673, %v1674
      %v1676 = vrot.slane %v1631, 1
      %v1677 = vsel %vm381, %v1674, %v1676
      %v1678 = vrot.slane %v1622, 1
      %v1679 = vrot.slane %v1576, 1
      %v1680 = vsel %vm381, %v1678, %v1679
      %v1681 = vrot.slane %v1632, 1
      %v1682 = vsel %vm381, %v1679, %v1681
      %v1683 = vrot.slane %v1623, 1
      %v1684 = vrot.slane %v1579, 1
      %v1685 = vsel %vm381, %v1683, %v1684
      %v1686 = vrot.slane %v1633, 1
      %v1687 = vsel %vm381, %v1684, %v1686
      %v1688 = vrot.slane %v1624, 1
      %v1689 = vrot.slane %v1582, 1
      %v1690 = vsel %vm381, %v1688, %v1689
      %v1691 = vrot.slane %v1634, 1
      %v1692 = vsel %vm381, %v1689, %v1691
      %1693 = vrot.lane.b32.xlu0 %v1655, 8
      %v1694 = vpop.permute.xlu0 %1693
      %1695 = vrot.lane.b32.xlu0 %v1657, 8
      %v1696 = vpop.permute.xlu0 %1695
      %1697 = vrot.lane.b32.xlu0 %v1660, 8
      %v1698 = vpop.permute.xlu0 %1697
      %1699 = vrot.lane.b32.xlu0 %v1662, 8
      %v1700 = vpop.permute.xlu0 %1699
      %1701 = vrot.lane.b32.xlu0 %v1665, 8
      %v1702 = vpop.permute.xlu0 %1701
      %1703 = vrot.lane.b32.xlu0 %v1667, 8
      %v1704 = vpop.permute.xlu0 %1703
      %1705 = vrot.lane.b32.xlu0 %v1670, 8
      %v1706 = vpop.permute.xlu0 %1705
      %1707 = vrot.lane.b32.xlu0 %v1672, 8
      %v1708 = vpop.permute.xlu0 %1707
      %1709 = vrot.lane.b32.xlu0 %v1675, 8
      %v1710 = vpop.permute.xlu0 %1709
      %1711 = vrot.lane.b32.xlu0 %v1677, 8
      %v1712 = vpop.permute.xlu0 %1711
      %1713 = vrot.lane.b32.xlu0 %v1680, 8
      %v1714 = vpop.permute.xlu0 %1713
      %1715 = vrot.lane.b32.xlu0 %v1682, 8
      %v1716 = vpop.permute.xlu0 %1715
      %1717 = vrot.lane.b32.xlu0 %v1685, 8
      %v1718 = vpop.permute.xlu0 %1717
      %1719 = vrot.lane.b32.xlu0 %v1687, 8
      %v1720 = vpop.permute.xlu0 %1719
      %1721 = vrot.lane.b32.xlu0 %v1690, 8
      %v1722 = vpop.permute.xlu0 %1721
      %1723 = vrot.lane.b32.xlu0 %v1692, 8
      %v1724 = vpop.permute.xlu0 %1723
      %v1741 = vrot.slane %v1617, 2
      %v1742 = vrot.slane %v1561, 2
      %v1743 = vsel %vm492, %v1741, %v1742
      %v1744 = vrot.slane %v1627, 2
      %v1745 = vsel %vm492, %v1742, %v1744
      %v1746 = vrot.slane %v1618, 2
      %v1747 = vrot.slane %v1564, 2
      %v1748 = vsel %vm492, %v1746, %v1747
      %v1749 = vrot.slane %v1628, 2
      %v1750 = vsel %vm492, %v1747, %v1749
      %v1751 = vrot.slane %v1619, 2
      %v1752 = vrot.slane %v1567, 2
      %v1753 = vsel %vm492, %v1751, %v1752
      %v1754 = vrot.slane %v1629, 2
      %v1755 = vsel %vm492, %v1752, %v1754
      %v1756 = vrot.slane %v1620, 2
      %v1757 = vrot.slane %v1570, 2
      %v1758 = vsel %vm492, %v1756, %v1757
      %v1759 = vrot.slane %v1630, 2
      %v1760 = vsel %vm492, %v1757, %v1759
      %v1761 = vrot.slane %v1621, 2
      %v1762 = vrot.slane %v1573, 2
      %v1763 = vsel %vm492, %v1761, %v1762
      %v1764 = vrot.slane %v1631, 2
      %v1765 = vsel %vm492, %v1762, %v1764
      %v1766 = vrot.slane %v1622, 2
      %v1767 = vrot.slane %v1576, 2
      %v1768 = vsel %vm492, %v1766, %v1767
      %v1769 = vrot.slane %v1632, 2
      %v1770 = vsel %vm492, %v1767, %v1769
      %v1771 = vrot.slane %v1623, 2
      %v1772 = vrot.slane %v1579, 2
      %v1773 = vsel %vm492, %v1771, %v1772
      %v1774 = vrot.slane %v1633, 2
      %v1775 = vsel %vm492, %v1772, %v1774
      %v1776 = vrot.slane %v1624, 2
      %v1777 = vrot.slane %v1582, 2
      %v1778 = vsel %vm492, %v1776, %v1777
      %v1779 = vrot.slane %v1634, 2
      %v1780 = vsel %vm492, %v1777, %v1779
      %1781 = vrot.lane.b32.xlu0 %v1743, 16
      %v1782 = vpop.permute.xlu0 %1781
      %1783 = vrot.lane.b32.xlu0 %v1745, 16
      %v1784 = vpop.permute.xlu0 %1783
      %1785 = vrot.lane.b32.xlu0 %v1748, 16
      %v1786 = vpop.permute.xlu0 %1785
      %1787 = vrot.lane.b32.xlu0 %v1750, 16
      %v1788 = vpop.permute.xlu0 %1787
      %1789 = vrot.lane.b32.xlu0 %v1753, 16
      %v1790 = vpop.permute.xlu0 %1789
      %1791 = vrot.lane.b32.xlu0 %v1755, 16
      %v1792 = vpop.permute.xlu0 %1791
      %1793 = vrot.lane.b32.xlu0 %v1758, 16
      %v1794 = vpop.permute.xlu0 %1793
      %1795 = vrot.lane.b32.xlu0 %v1760, 16
      %v1796 = vpop.permute.xlu0 %1795
      %1797 = vrot.lane.b32.xlu0 %v1763, 16
      %v1798 = vpop.permute.xlu0 %1797
      %1799 = vrot.lane.b32.xlu0 %v1765, 16
      %v1800 = vpop.permute.xlu0 %1799
      %1801 = vrot.lane.b32.xlu0 %v1768, 16
      %v1802 = vpop.permute.xlu0 %1801
      %1803 = vrot.lane.b32.xlu0 %v1770, 16
      %v1804 = vpop.permute.xlu0 %1803
      %1805 = vrot.lane.b32.xlu0 %v1773, 16
      %v1806 = vpop.permute.xlu0 %1805
      %1807 = vrot.lane.b32.xlu0 %v1775, 16
      %v1808 = vpop.permute.xlu0 %1807
      %1809 = vrot.lane.b32.xlu0 %v1778, 16
      %v1810 = vpop.permute.xlu0 %1809
      %1811 = vrot.lane.b32.xlu0 %v1780, 16
      %v1812 = vpop.permute.xlu0 %1811
      %1830 = vrot.lane.b32.xlu0 %v1618, 24
      %v1831 = vpop.permute.xlu0 %1830
      %1832 = vrot.lane.b32.xlu0 %v1564, 24
      %v1833 = vpop.permute.xlu0 %1832
      %1834 = vrot.lane.b32.xlu0 %v1619, 24
      %v1835 = vpop.permute.xlu0 %1834
      %1836 = vrot.lane.b32.xlu0 %v1567, 24
      %v1837 = vpop.permute.xlu0 %1836
      %1838 = vrot.lane.b32.xlu0 %v1620, 24
      %v1839 = vpop.permute.xlu0 %1838
      %1840 = vrot.lane.b32.xlu0 %v1570, 24
      %v1841 = vpop.permute.xlu0 %1840
      %1842 = vrot.lane.b32.xlu0 %v1621, 24
      %v1843 = vpop.permute.xlu0 %1842
      %1844 = vrot.lane.b32.xlu0 %v1573, 24
      %v1845 = vpop.permute.xlu0 %1844
      %1846 = vrot.lane.b32.xlu0 %v1622, 24
      %v1847 = vpop.permute.xlu0 %1846
      %1848 = vrot.lane.b32.xlu0 %v1576, 24
      %v1849 = vpop.permute.xlu0 %1848
      %1850 = vrot.lane.b32.xlu0 %v1623, 24
      %v1851 = vpop.permute.xlu0 %1850
      %1852 = vrot.lane.b32.xlu0 %v1579, 24
      %v1853 = vpop.permute.xlu0 %1852
      %1854 = vrot.lane.b32.xlu0 %v1624, 24
      %v1855 = vpop.permute.xlu0 %1854
      %1856 = vrot.lane.b32.xlu0 %v1582, 24
      %v1857 = vpop.permute.xlu0 %1856
      %1858 = vrot.lane.b32.xlu0 %v1625, 24
      %v1859 = vpop.permute.xlu0 %1858
      %1860 = vrot.lane.b32.xlu0 %v1585, 24
      %v1861 = vpop.permute.xlu0 %1860
      %v1879 = vrot.slane %v1625, 1
      %v1880 = vrot.slane %v1585, 1
      %v1881 = vsel %vm381, %v1879, %v1880
      %v1882 = vrot.slane %v1635, 1
      %v1883 = vsel %vm381, %v1880, %v1882
      %1884 = vrot.lane.b32.xlu0 %v1660, 32
      %v1885 = vpop.permute.xlu0 %1884
      %1886 = vrot.lane.b32.xlu0 %v1662, 32
      %v1887 = vpop.permute.xlu0 %1886
      %1888 = vrot.lane.b32.xlu0 %v1665, 32
      %v1889 = vpop.permute.xlu0 %1888
      %1890 = vrot.lane.b32.xlu0 %v1667, 32
      %v1891 = vpop.permute.xlu0 %1890
      %1892 = vrot.lane.b32.xlu0 %v1670, 32
      %v1893 = vpop.permute.xlu0 %1892
      %1894 = vrot.lane.b32.xlu0 %v1672, 32
      %v1895 = vpop.permute.xlu0 %1894
      %1896 = vrot.lane.b32.xlu0 %v1675, 32
      %v1897 = vpop.permute.xlu0 %1896
      %1898 = vrot.lane.b32.xlu0 %v1677, 32
      %v1899 = vpop.permute.xlu0 %1898
      %1900 = vrot.lane.b32.xlu0 %v1680, 32
      %v1901 = vpop.permute.xlu0 %1900
      %1902 = vrot.lane.b32.xlu0 %v1682, 32
      %v1903 = vpop.permute.xlu0 %1902
      %1904 = vrot.lane.b32.xlu0 %v1685, 32
      %v1905 = vpop.permute.xlu0 %1904
      %1906 = vrot.lane.b32.xlu0 %v1687, 32
      %v1907 = vpop.permute.xlu0 %1906
      %1908 = vrot.lane.b32.xlu0 %v1690, 32
      %v1909 = vpop.permute.xlu0 %1908
      %1910 = vrot.lane.b32.xlu0 %v1692, 32
      %v1911 = vpop.permute.xlu0 %1910
      %1912 = vrot.lane.b32.xlu0 %v1881, 32
      %v1913 = vpop.permute.xlu0 %1912
      %1914 = vrot.lane.b32.xlu0 %v1883, 32
      %v1915 = vpop.permute.xlu0 %1914
      %v1932 = vrot.slane %v1625, 2
      %v1933 = vrot.slane %v1585, 2
      %v1934 = vsel %vm492, %v1932, %v1933
      %v1935 = vrot.slane %v1635, 2
      %v1936 = vsel %vm492, %v1933, %v1935
      %1937 = vrot.lane.b32.xlu0 %v1748, 40
      %v1938 = vpop.permute.xlu0 %1937
      %1939 = vrot.lane.b32.xlu0 %v1750, 40
      %v1940 = vpop.permute.xlu0 %1939
      %1941 = vrot.lane.b32.xlu0 %v1753, 40
      %v1942 = vpop.permute.xlu0 %1941
      %1943 = vrot.lane.b32.xlu0 %v1755, 40
      %v1944 = vpop.permute.xlu0 %1943
      %1945 = vrot.lane.b32.xlu0 %v1758, 40
      %v1946 = vpop.permute.xlu0 %1945
      %1947 = vrot.lane.b32.xlu0 %v1760, 40
      %v1948 = vpop.permute.xlu0 %1947
      %1949 = vrot.lane.b32.xlu0 %v1763, 40
      %v1950 = vpop.permute.xlu0 %1949
      %1951 = vrot.lane.b32.xlu0 %v1765, 40
      %v1952 = vpop.permute.xlu0 %1951
      %1953 = vrot.lane.b32.xlu0 %v1768, 40
      %v1954 = vpop.permute.xlu0 %1953
      %1955 = vrot.lane.b32.xlu0 %v1770, 40
      %v1956 = vpop.permute.xlu0 %1955
      %1957 = vrot.lane.b32.xlu0 %v1773, 40
      %v1958 = vpop.permute.xlu0 %1957
      %1959 = vrot.lane.b32.xlu0 %v1775, 40
      %v1960 = vpop.permute.xlu0 %1959
      %1961 = vrot.lane.b32.xlu0 %v1778, 40
      %v1962 = vpop.permute.xlu0 %1961
      %1963 = vrot.lane.b32.xlu0 %v1780, 40
      %v1964 = vpop.permute.xlu0 %1963
      %1965 = vrot.lane.b32.xlu0 %v1934, 40
      %v1966 = vpop.permute.xlu0 %1965
      %1967 = vrot.lane.b32.xlu0 %v1936, 40
      %v1968 = vpop.permute.xlu0 %1967
      %1986 = vrot.lane.b32.xlu0 %v1619, 48
      %v1987 = vpop.permute.xlu0 %1986
      %1988 = vrot.lane.b32.xlu0 %v1567, 48
      %v1989 = vpop.permute.xlu0 %1988
      %1990 = vrot.lane.b32.xlu0 %v1620, 48
      %v1991 = vpop.permute.xlu0 %1990
      %1992 = vrot.lane.b32.xlu0 %v1570, 48
      %v1993 = vpop.permute.xlu0 %1992
      %1994 = vrot.lane.b32.xlu0 %v1621, 48
      %v1995 = vpop.permute.xlu0 %1994
      %1996 = vrot.lane.b32.xlu0 %v1573, 48
      %v1997 = vpop.permute.xlu0 %1996
      %1998 = vrot.lane.b32.xlu0 %v1622, 48
      %v1999 = vpop.permute.xlu0 %1998
      %2000 = vrot.lane.b32.xlu0 %v1576, 48
      %v2001 = vpop.permute.xlu0 %2000
      %2002 = vrot.lane.b32.xlu0 %v1623, 48
      %v2003 = vpop.permute.xlu0 %2002
      %2004 = vrot.lane.b32.xlu0 %v1579, 48
      %v2005 = vpop.permute.xlu0 %2004
      %2006 = vrot.lane.b32.xlu0 %v1624, 48
      %v2007 = vpop.permute.xlu0 %2006
      %2008 = vrot.lane.b32.xlu0 %v1582, 48
      %v2009 = vpop.permute.xlu0 %2008
      %2010 = vrot.lane.b32.xlu0 %v1625, 48
      %v2011 = vpop.permute.xlu0 %2010
      %2012 = vrot.lane.b32.xlu0 %v1585, 48
      %v2013 = vpop.permute.xlu0 %2012
      %2014 = vrot.lane.b32.xlu0 %v1626, 48
      %v2015 = vpop.permute.xlu0 %2014
      %2016 = vrot.lane.b32.xlu0 %v1588, 48
      %v2017 = vpop.permute.xlu0 %2016
      %v2035 = vrot.slane %v1626, 1
      %v2036 = vrot.slane %v1588, 1
      %v2037 = vsel %vm381, %v2035, %v2036
      %v2038 = vrot.slane %v1636, 1
      %v2039 = vsel %vm381, %v2036, %v2038
      %2040 = vrot.lane.b32.xlu0 %v1665, 56
      %v2041 = vpop.permute.xlu0 %2040
      %2042 = vrot.lane.b32.xlu0 %v1667, 56
      %v2043 = vpop.permute.xlu0 %2042
      %2044 = vrot.lane.b32.xlu0 %v1670, 56
      %v2045 = vpop.permute.xlu0 %2044
      %2046 = vrot.lane.b32.xlu0 %v1672, 56
      %v2047 = vpop.permute.xlu0 %2046
      %2048 = vrot.lane.b32.xlu0 %v1675, 56
      %v2049 = vpop.permute.xlu0 %2048
      %2050 = vrot.lane.b32.xlu0 %v1677, 56
      %v2051 = vpop.permute.xlu0 %2050
      %2052 = vrot.lane.b32.xlu0 %v1680, 56
      %v2053 = vpop.permute.xlu0 %2052
      %2054 = vrot.lane.b32.xlu0 %v1682, 56
      %v2055 = vpop.permute.xlu0 %2054
      %2056 = vrot.lane.b32.xlu0 %v1685, 56
      %v2057 = vpop.permute.xlu0 %2056
      %2058 = vrot.lane.b32.xlu0 %v1687, 56
      %v2059 = vpop.permute.xlu0 %2058
      %2060 = vrot.lane.b32.xlu0 %v1690, 56
      %v2061 = vpop.permute.xlu0 %2060
      %2062 = vrot.lane.b32.xlu0 %v1692, 56
      %v2063 = vpop.permute.xlu0 %2062
      %2064 = vrot.lane.b32.xlu0 %v1881, 56
      %v2065 = vpop.permute.xlu0 %2064
      %2066 = vrot.lane.b32.xlu0 %v1883, 56
      %v2067 = vpop.permute.xlu0 %2066
      %2068 = vrot.lane.b32.xlu0 %v2037, 56
      %v2069 = vpop.permute.xlu0 %2068
      %2070 = vrot.lane.b32.xlu0 %v2039, 56
      %v2071 = vpop.permute.xlu0 %2070
      %v2088 = vrot.slane %v1626, 2
      %v2089 = vrot.slane %v1588, 2
      %v2090 = vsel %vm492, %v2088, %v2089
      %v2091 = vrot.slane %v1636, 2
      %v2092 = vsel %vm492, %v2089, %v2091
      %2093 = vrot.lane.b32.xlu0 %v1753, 64
      %v2094 = vpop.permute.xlu0 %2093
      %2095 = vrot.lane.b32.xlu0 %v1755, 64
      %v2096 = vpop.permute.xlu0 %2095
      %2097 = vrot.lane.b32.xlu0 %v1758, 64
      %v2098 = vpop.permute.xlu0 %2097
      %2099 = vrot.lane.b32.xlu0 %v1760, 64
      %v2100 = vpop.permute.xlu0 %2099
      %2101 = vrot.lane.b32.xlu0 %v1763, 64
      %v2102 = vpop.permute.xlu0 %2101
      %2103 = vrot.lane.b32.xlu0 %v1765, 64
      %v2104 = vpop.permute.xlu0 %2103
      %2105 = vrot.lane.b32.xlu0 %v1768, 64
      %v2106 = vpop.permute.xlu0 %2105
      %2107 = vrot.lane.b32.xlu0 %v1770, 64
      %v2108 = vpop.permute.xlu0 %2107
      %2109 = vrot.lane.b32.xlu0 %v1773, 64
      %v2110 = vpop.permute.xlu0 %2109
      %2111 = vrot.lane.b32.xlu0 %v1775, 64
      %v2112 = vpop.permute.xlu0 %2111
      %2113 = vrot.lane.b32.xlu0 %v1778, 64
      %v2114 = vpop.permute.xlu0 %2113
      %2115 = vrot.lane.b32.xlu0 %v1780, 64
      %v2116 = vpop.permute.xlu0 %2115
      %2117 = vrot.lane.b32.xlu0 %v1934, 64
      %v2118 = vpop.permute.xlu0 %2117
      %2119 = vrot.lane.b32.xlu0 %v1936, 64
      %v2120 = vpop.permute.xlu0 %2119
      %2121 = vrot.lane.b32.xlu0 %v2090, 64
      %v2122 = vpop.permute.xlu0 %2121
      %2123 = vrot.lane.b32.xlu0 %v2092, 64
      %v2124 = vpop.permute.xlu0 %2123
      %v2141 = vsel %vm1010, %v1617, %v1694
      %v2142 = vsel %vm1010, %v1561, %v1696
      %v2143 = vsel %vm1010, %v1618, %v1698
      %v2144 = vsel %vm1010, %v1564, %v1700
      %v2145 = vsel %vm1010, %v1619, %v1702
      %v2146 = vsel %vm1010, %v1567, %v1704
      %v2147 = vsel %vm1010, %v1620, %v1706
      %v2148 = vsel %vm1010, %v1570, %v1708
      %v2149 = vsel %vm1010, %v1621, %v1710
      %v2150 = vsel %vm1010, %v1573, %v1712
      %v2151 = vsel %vm1010, %v1622, %v1714
      %v2152 = vsel %vm1010, %v1576, %v1716
      %v2153 = vsel %vm1010, %v1623, %v1718
      %v2154 = vsel %vm1010, %v1579, %v1720
      %v2155 = vsel %vm1010, %v1624, %v1722
      %v2156 = vsel %vm1010, %v1582, %v1724
      %v2157 = vsel %vm1052, %v2141, %v1782
      %v2158 = vsel %vm1052, %v2142, %v1784
      %v2159 = vsel %vm1052, %v2143, %v1786
      %v2160 = vsel %vm1052, %v2144, %v1788
      %v2161 = vsel %vm1052, %v2145, %v1790
      %v2162 = vsel %vm1052, %v2146, %v1792
      %v2163 = vsel %vm1052, %v2147, %v1794
      %v2164 = vsel %vm1052, %v2148, %v1796
      %v2165 = vsel %vm1052, %v2149, %v1798
      %v2166 = vsel %vm1052, %v2150, %v1800
      %v2167 = vsel %vm1052, %v2151, %v1802
      %v2168 = vsel %vm1052, %v2152, %v1804
      %v2169 = vsel %vm1052, %v2153, %v1806
      %v2170 = vsel %vm1052, %v2154, %v1808
      %v2171 = vsel %vm1052, %v2155, %v1810
      %v2172 = vsel %vm1052, %v2156, %v1812
      %v2173 = vsel %vm1094, %v2157, %v1831
      %v2174 = vsel %vm1094, %v2158, %v1833
      %v2175 = vsel %vm1094, %v2159, %v1835
      %v2176 = vsel %vm1094, %v2160, %v1837
      %v2177 = vsel %vm1094, %v2161, %v1839
      %v2178 = vsel %vm1094, %v2162, %v1841
      %v2179 = vsel %vm1094, %v2163, %v1843
      %v2180 = vsel %vm1094, %v2164, %v1845
      %v2181 = vsel %vm1094, %v2165, %v1847
      %v2182 = vsel %vm1094, %v2166, %v1849
      %v2183 = vsel %vm1094, %v2167, %v1851
      %v2184 = vsel %vm1094, %v2168, %v1853
      %v2185 = vsel %vm1094, %v2169, %v1855
      %v2186 = vsel %vm1094, %v2170, %v1857
      %v2187 = vsel %vm1094, %v2171, %v1859
      %v2188 = vsel %vm1094, %v2172, %v1861
      %v2189 = vsel %vm1136, %v2173, %v1885
      %v2190 = vsel %vm1136, %v2174, %v1887
      %v2191 = vsel %vm1136, %v2175, %v1889
      %v2192 = vsel %vm1136, %v2176, %v1891
      %v2193 = vsel %vm1136, %v2177, %v1893
      %v2194 = vsel %vm1136, %v2178, %v1895
      %v2195 = vsel %vm1136, %v2179, %v1897
      %v2196 = vsel %vm1136, %v2180, %v1899
      %v2197 = vsel %vm1136, %v2181, %v1901
      %v2198 = vsel %vm1136, %v2182, %v1903
      %v2199 = vsel %vm1136, %v2183, %v1905
      %v2200 = vsel %vm1136, %v2184, %v1907
      %v2201 = vsel %vm1136, %v2185, %v1909
      %v2202 = vsel %vm1136, %v2186, %v1911
      %v2203 = vsel %vm1136, %v2187, %v1913
      %v2204 = vsel %vm1136, %v2188, %v1915
      %vm2205 = vcmask 326656
      %v2206 = vsel %vm2205, %v2189, %v1938
      %v2207 = vsel %vm2205, %v2190, %v1940
      %v2208 = vsel %vm2205, %v2191, %v1942
      %v2209 = vsel %vm2205, %v2192, %v1944
      %v2210 = vsel %vm2205, %v2193, %v1946
      %v2211 = vsel %vm2205, %v2194, %v1948
      %v2212 = vsel %vm2205, %v2195, %v1950
      %v2213 = vsel %vm2205, %v2196, %v1952
      %v2214 = vsel %vm2205, %v2197, %v1954
      %v2215 = vsel %vm2205, %v2198, %v1956
      %v2216 = vsel %vm2205, %v2199, %v1958
      %v2217 = vsel %vm2205, %v2200, %v1960
      %v2218 = vsel %vm2205, %v2201, %v1962
      %v2219 = vsel %vm2205, %v2202, %v1964
      %v2220 = vsel %vm2205, %v2203, %v1966
      %v2221 = vsel %vm2205, %v2204, %v1968
      %vm2222 = vcmask 392192
      %v2223 = vsel %vm2222, %v2206, %v1987
      %v2224 = vsel %vm2222, %v2207, %v1989
      %v2225 = vsel %vm2222, %v2208, %v1991
      %v2226 = vsel %vm2222, %v2209, %v1993
      %v2227 = vsel %vm2222, %v2210, %v1995
      %v2228 = vsel %vm2222, %v2211, %v1997
      %v2229 = vsel %vm2222, %v2212, %v1999
      %v2230 = vsel %vm2222, %v2213, %v2001
      %v2231 = vsel %vm2222, %v2214, %v2003
      %v2232 = vsel %vm2222, %v2215, %v2005
      %v2233 = vsel %vm2222, %v2216, %v2007
      %v2234 = vsel %vm2222, %v2217, %v2009
      %v2235 = vsel %vm2222, %v2218, %v2011
      %v2236 = vsel %vm2222, %v2219, %v2013
      %v2237 = vsel %vm2222, %v2220, %v2015
      %v2238 = vsel %vm2222, %v2221, %v2017
      %vm2239 = vcmask 457728
      %v2240 = vsel %vm2239, %v2223, %v2041
      %v2241 = vsel %vm2239, %v2224, %v2043
      %v2242 = vsel %vm2239, %v2225, %v2045
      %v2243 = vsel %vm2239, %v2226, %v2047
      %v2244 = vsel %vm2239, %v2227, %v2049
      %v2245 = vsel %vm2239, %v2228, %v2051
      %v2246 = vsel %vm2239, %v2229, %v2053
      %v2247 = vsel %vm2239, %v2230, %v2055
      %v2248 = vsel %vm2239, %v2231, %v2057
      %v2249 = vsel %vm2239, %v2232, %v2059
      %v2250 = vsel %vm2239, %v2233, %v2061
      %v2251 = vsel %vm2239, %v2234, %v2063
      %v2252 = vsel %vm2239, %v2235, %v2065
      %v2253 = vsel %vm2239, %v2236, %v2067
      %v2254 = vsel %vm2239, %v2237, %v2069
      %v2255 = vsel %vm2239, %v2238, %v2071
      %vm2256 = vcmask 523264
      %v2257 = vsel %vm2256, %v2240, %v2094
      %v2258 = vsel %vm2256, %v2241, %v2096
      %v2259 = vsel %vm2256, %v2242, %v2098
      %v2260 = vsel %vm2256, %v2243, %v2100
      %v2261 = vsel %vm2256, %v2244, %v2102
      %v2262 = vsel %vm2256, %v2245, %v2104
      %v2263 = vsel %vm2256, %v2246, %v2106
      %v2264 = vsel %vm2256, %v2247, %v2108
      %v2265 = vsel %vm2256, %v2248, %v2110
      %v2266 = vsel %vm2256, %v2249, %v2112
      %v2267 = vsel %vm2256, %v2250, %v2114
      %v2268 = vsel %vm2256, %v2251, %v2116
      %v2269 = vsel %vm2256, %v2252, %v2118
      %v2270 = vsel %vm2256, %v2253, %v2120
      %v2271 = vsel %vm2256, %v2254, %v2122
      %v2272 = vsel %vm2256, %v2255, %v2124
      %v2273 = vld [vmem:[%s4] sm:$0xff]
      %v2274 = vld [vmem:[%s4 + $0x8] sm:$0xff]
      %v2275 = vld [vmem:[%s4 + $0x10] sm:$0xff]
      %v2276 = vld [vmem:[%s4 + $0x18] sm:$0xff]
      %v2277 = vld [vmem:[%s4 + $0x20] sm:$0xff]
      %v2278 = vld [vmem:[%s4 + $0x28] sm:$0xff]
      %v2279 = vld [vmem:[%s4 + $0x30] sm:$0xff]
      %v2280 = vld [vmem:[%s4 + $0x38] sm:$0xff]
      %v2281 = vld [vmem:[%s4 + $0x40] sm:$0xff]
      %vm2282 = vcmask 588800
      %v2284 = vsel %vm2282, %v2257, 0
      %v2287 = vsel %vm2282, %v2258, 0
      %v2290 = vsel %vm2282, %v2259, 0
      %v2293 = vsel %vm2282, %v2260, 0
      %v2296 = vsel %vm2282, %v2261, 0
      %v2299 = vsel %vm2282, %v2262, 0
      %v2302 = vsel %vm2282, %v2263, 0
      %v2305 = vsel %vm2282, %v2264, 0
      %v2308 = vsel %vm2282, %v2265, 0
      %v2311 = vsel %vm2282, %v2266, 0
      %v2314 = vsel %vm2282, %v2267, 0
      %v2317 = vsel %vm2282, %v2268, 0
      %v2320 = vsel %vm2282, %v2269, 0
      %v2323 = vsel %vm2282, %v2270, 0
      %v2326 = vsel %vm2282, %v2271, 0
      %v2329 = vsel %vm2282, %v2272, 0
      %2331 = vmatprep.subr.mxu0 0.0
      %2332 = vmatpush1.msra.mxu0 0.0
      %2333 = vmatprep.subr.mxu0 0.0
      %2334 = vmatpush1.msra.mxu0 0.0
      %2335 = vmatprep.subr.mxu0 0.0
      %2336 = vmatpush1.msra.mxu0 0.0
      %2337 = vmatprep.subr.mxu0 0.0
      %2338 = vmatpush1.msra.mxu0 0.0
      %2339 = vmatprep.subr.mxu0 0.0
      %2340 = vmatpush1.msra.mxu0 0.0
      %2341 = vmatprep.subr.mxu0 0.0
      %2342 = vmatpush1.msra.mxu0 0.0
      %2343 = vmatprep.subr.mxu0 0.0
      %2344 = vmatpush1.msra.mxu0 0.0
      %2345 = vmatprep.subr.mxu0 0.0
      %2346 = vmatpush1.msra.mxu0 %v2281
      %2347 = vmatprep.subr.mxu0 0.0
      %2348 = vmatpush1.msra.mxu0 %v2280
      %2349 = vmatprep.subr.mxu0 0.0
      %2350 = vmatpush1.msra.mxu0 %v2279
      %2351 = vmatprep.subr.mxu0 0.0
      %2352 = vmatpush1.msra.mxu0 %v2278
      %2353 = vmatprep.subr.mxu0 0.0
      %2354 = vmatpush1.msra.mxu0 %v2277
      %2355 = vmatprep.subr.mxu0 0.0
      %2356 = vmatpush1.msra.mxu0 %v2276
      %2357 = vmatprep.subr.mxu0 0.0
      %2358 = vmatpush1.msra.mxu0 %v2275
      %2359 = vmatprep.subr.mxu0 0.0
      %2360 = vmatpush1.msra.mxu0 %v2274
      %2361 = vmatprep.subr.mxu0 0.0
      %2362 = vmatpush1.msra.mxu0 %v2273
      %2363 = vmatprep.subr.mxu0 0.0
      %2364 = vmatpush2.msra.mxu0 0.0
      %2365 = vmatprep.subr.mxu0 0.0
      %2366 = vmatpush2.msra.mxu0 0.0
      %2367 = vmatprep.subr.mxu0 0.0
      %2368 = vmatpush2.msra.mxu0 0.0
      %2369 = vmatprep.subr.mxu0 0.0
      %2370 = vmatpush2.msra.mxu0 0.0
      %2371 = vmatprep.subr.mxu0 0.0
      %2372 = vmatpush2.msra.mxu0 0.0
      %2373 = vmatprep.subr.mxu0 0.0
      %2374 = vmatpush2.msra.mxu0 0.0
      %2375 = vmatprep.subr.mxu0 0.0
      %2376 = vmatpush2.msra.mxu0 0.0
      %2377 = vmatprep.subr.mxu0 0.0
      %2378 = vmatpush2.msra.mxu0 0.0
      %2379 = vmatprep.subr.mxu0 0.0
      %2380 = vmatpush2.msra.mxu0 0.0
      %2381 = vmatprep.subr.mxu0 0.0
      %2382 = vmatpush2.msra.mxu0 0.0
      %2383 = vmatprep.subr.mxu0 0.0
      %2384 = vmatpush2.msra.mxu0 0.0
      %2385 = vmatprep.subr.mxu0 0.0
      %2386 = vmatpush2.msra.mxu0 0.0
      %2387 = vmatprep.subr.mxu0 0.0
      %2388 = vmatpush2.msra.mxu0 0.0
      %2389 = vmatprep.subr.mxu0 0.0
      %2390 = vmatpush2.msra.mxu0 0.0
      %2391 = vmatprep.subr.mxu0 0.0
      %2392 = vmatpush2.msra.mxu0 0.0
      %2393 = vmatprep.subr.mxu0 0.0
      %2394 = vmatpush2.msra.mxu0 0.0
      %2395 = vmatprep.mubr.f32.mxu0 0.0
      %2396 = vmatmul.mubr.f32.gmra.mxu0 %v2284
      %v2397 = vpop.f32.mrf.mxu0
      %v2398 = vadd.f32 0.0, %v2397
      %v2399 = vpop.f32.mrf.mxu0
      %2400 = vmatprep.mubr.f32.mxu0 0.0
      %2401 = vmatmul.mubr.f32.gmra.mxu0 %v2287
      %v2402 = vpop.f32.mrf.mxu0
      %v2403 = vadd.f32 0.0, %v2402
      %v2404 = vpop.f32.mrf.mxu0
      %2405 = vmatprep.mubr.f32.mxu0 0.0
      %2406 = vmatmul.mubr.f32.gmra.mxu0 %v2290
      %v2407 = vpop.f32.mrf.mxu0
      %v2408 = vadd.f32 0.0, %v2407
      %v2409 = vpop.f32.mrf.mxu0
      %2410 = vmatprep.mubr.f32.mxu0 0.0
      %2411 = vmatmul.mubr.f32.gmra.mxu0 %v2293
      %v2412 = vpop.f32.mrf.mxu0
      %v2413 = vadd.f32 0.0, %v2412
      %v2414 = vpop.f32.mrf.mxu0
      %2415 = vmatprep.mubr.f32.mxu0 0.0
      %2416 = vmatmul.mubr.f32.gmra.mxu0 %v2296
      %v2417 = vpop.f32.mrf.mxu0
      %v2418 = vadd.f32 0.0, %v2417
      %v2419 = vpop.f32.mrf.mxu0
      %2420 = vmatprep.mubr.f32.mxu0 0.0
      %2421 = vmatmul.mubr.f32.gmra.mxu0 %v2299
      %v2422 = vpop.f32.mrf.mxu0
      %v2423 = vadd.f32 0.0, %v2422
      %v2424 = vpop.f32.mrf.mxu0
      %2425 = vmatprep.mubr.f32.mxu0 0.0
      %2426 = vmatmul.mubr.f32.gmra.mxu0 %v2302
      %v2427 = vpop.f32.mrf.mxu0
      %v2428 = vadd.f32 0.0, %v2427
      %v2429 = vpop.f32.mrf.mxu0
      %2430 = vmatprep.mubr.f32.mxu0 0.0
      %2431 = vmatmul.mubr.f32.gmra.mxu0 %v2305
      %v2432 = vpop.f32.mrf.mxu0
      %v2433 = vadd.f32 0.0, %v2432
      %v2434 = vpop.f32.mrf.mxu0
      %2435 = vmatprep.mubr.f32.mxu0 0.0
      %2436 = vmatmul.mubr.f32.gmra.mxu0 %v2308
      %v2437 = vpop.f32.mrf.mxu0
      %v2438 = vadd.f32 0.0, %v2437
      %v2439 = vpop.f32.mrf.mxu0
      %2440 = vmatprep.mubr.f32.mxu0 0.0
      %2441 = vmatmul.mubr.f32.gmra.mxu0 %v2311
      %v2442 = vpop.f32.mrf.mxu0
      %v2443 = vadd.f32 0.0, %v2442
      %v2444 = vpop.f32.mrf.mxu0
      %2445 = vmatprep.mubr.f32.mxu0 0.0
      %2446 = vmatmul.mubr.f32.gmra.mxu0 %v2314
      %v2447 = vpop.f32.mrf.mxu0
      %v2448 = vadd.f32 0.0, %v2447
      %v2449 = vpop.f32.mrf.mxu0
      %2450 = vmatprep.mubr.f32.mxu0 0.0
      %2451 = vmatmul.mubr.f32.gmra.mxu0 %v2317
      %v2452 = vpop.f32.mrf.mxu0
      %v2453 = vadd.f32 0.0, %v2452
      %v2454 = vpop.f32.mrf.mxu0
      %2455 = vmatprep.mubr.f32.mxu0 0.0
      %2456 = vmatmul.mubr.f32.gmra.mxu0 %v2320
      %v2457 = vpop.f32.mrf.mxu0
      %v2458 = vadd.f32 0.0, %v2457
      %v2459 = vpop.f32.mrf.mxu0
      %2460 = vmatprep.mubr.f32.mxu0 0.0
      %2461 = vmatmul.mubr.f32.gmra.mxu0 %v2323
      %v2462 = vpop.f32.mrf.mxu0
      %v2463 = vadd.f32 0.0, %v2462
      %v2464 = vpop.f32.mrf.mxu0
      %2465 = vmatprep.mubr.f32.mxu0 0.0
      %2466 = vmatmul.mubr.f32.gmra.mxu0 %v2326
      %v2467 = vpop.f32.mrf.mxu0
      %v2468 = vadd.f32 0.0, %v2467
      %v2469 = vpop.f32.mrf.mxu0
      %2470 = vmatprep.mubr.f32.mxu0 0.0
      %2471 = vmatmul.mubr.f32.gmra.mxu0 %v2329
      %v2472 = vpop.f32.mrf.mxu0
      %v2473 = vadd.f32 0.0, %v2472
      %v2474 = vpop.f32.mrf.mxu0
      %2475 = vdwg.mxu0
      %v2476 = vld [vmem:[%s5] sm:$0x1]
      %v2478 = vlaneseq
      %v2479 = vshrl.u32 %v2478, 7
      %v2480 = vsub.s32 0, %v2479
      %v2481 = vrot.slane %v2476, %v2480
      %v2483 = vmul.f32 %v2398, %v2481
      %v2484 = vmul.f32 %v2403, %v2481
      %v2485 = vmul.f32 %v2408, %v2481
      %v2486 = vmul.f32 %v2413, %v2481
      %v2487 = vmul.f32 %v2418, %v2481
      %v2488 = vmul.f32 %v2423, %v2481
      %v2489 = vmul.f32 %v2428, %v2481
      %v2490 = vmul.f32 %v2433, %v2481
      %v2491 = vmul.f32 %v2438, %v2481
      %v2492 = vmul.f32 %v2443, %v2481
      %v2493 = vmul.f32 %v2448, %v2481
      %v2494 = vmul.f32 %v2453, %v2481
      %v2495 = vmul.f32 %v2458, %v2481
      %v2496 = vmul.f32 %v2463, %v2481
      %v2497 = vmul.f32 %v2468, %v2481
      %v2498 = vmul.f32 %v2473, %v2481
      %v2499 = vld [vmem:[%s6] sm:$0x1]
      %v2501 = vlaneseq
      %v2502 = vshrl.u32 %v2501, 7
      %v2503 = vsub.s32 0, %v2502
      %v2504 = vrot.slane %v2499, %v2503
      %v2506 = vadd.f32 %v2483, %v2504
      %v2507 = vadd.f32 %v2484, %v2504
      %v2508 = vadd.f32 %v2485, %v2504
      %v2509 = vadd.f32 %v2486, %v2504
      %v2510 = vadd.f32 %v2487, %v2504
      %v2511 = vadd.f32 %v2488, %v2504
      %v2512 = vadd.f32 %v2489, %v2504
      %v2513 = vadd.f32 %v2490, %v2504
      %v2514 = vadd.f32 %v2491, %v2504
      %v2515 = vadd.f32 %v2492, %v2504
      %v2516 = vadd.f32 %v2493, %v2504
      %v2517 = vadd.f32 %v2494, %v2504
      %v2518 = vadd.f32 %v2495, %v2504
      %v2519 = vadd.f32 %v2496, %v2504
      %v2520 = vadd.f32 %v2497, %v2504
      %v2521 = vadd.f32 %v2498, %v2504
      %vm2522 = vcmp.ge.f32.partialorder %v2506, 0.0
      %vm2523 = vcmp.ge.f32.partialorder %v2507, 0.0
      %vm2524 = vcmp.ge.f32.partialorder %v2508, 0.0
      %vm2525 = vcmp.ge.f32.partialorder %v2509, 0.0
      %vm2526 = vcmp.ge.f32.partialorder %v2510, 0.0
      %vm2527 = vcmp.ge.f32.partialorder %v2511, 0.0
      %vm2528 = vcmp.ge.f32.partialorder %v2512, 0.0
      %vm2529 = vcmp.ge.f32.partialorder %v2513, 0.0
      %vm2530 = vcmp.ge.f32.partialorder %v2514, 0.0
      %vm2531 = vcmp.ge.f32.partialorder %v2515, 0.0
      %vm2532 = vcmp.ge.f32.partialorder %v2516, 0.0
      %vm2533 = vcmp.ge.f32.partialorder %v2517, 0.0
      %vm2534 = vcmp.ge.f32.partialorder %v2518, 0.0
      %vm2535 = vcmp.ge.f32.partialorder %v2519, 0.0
      %vm2536 = vcmp.ge.f32.partialorder %v2520, 0.0
      %vm2537 = vcmp.ge.f32.partialorder %v2521, 0.0
      %v2538 = vmul.f32 %v2506, 0.1
      %v2539 = vmul.f32 %v2507, 0.1
      %v2540 = vmul.f32 %v2508, 0.1
      %v2541 = vmul.f32 %v2509, 0.1
      %v2542 = vmul.f32 %v2510, 0.1
      %v2543 = vmul.f32 %v2511, 0.1
      %v2544 = vmul.f32 %v2512, 0.1
      %v2545 = vmul.f32 %v2513, 0.1
      %v2546 = vmul.f32 %v2514, 0.1
      %v2547 = vmul.f32 %v2515, 0.1
      %v2548 = vmul.f32 %v2516, 0.1
      %v2549 = vmul.f32 %v2517, 0.1
      %v2550 = vmul.f32 %v2518, 0.1
      %v2551 = vmul.f32 %v2519, 0.1
      %v2552 = vmul.f32 %v2520, 0.1
      %v2553 = vmul.f32 %v2521, 0.1
      %v2554 = vsel %vm2522, %v2506, %v2538
      %v2555 = vsel %vm2523, %v2507, %v2539
      %v2556 = vsel %vm2524, %v2508, %v2540
      %v2557 = vsel %vm2525, %v2509, %v2541
      %v2558 = vsel %vm2526, %v2510, %v2542
      %v2559 = vsel %vm2527, %v2511, %v2543
      %v2560 = vsel %vm2528, %v2512, %v2544
      %v2561 = vsel %vm2529, %v2513, %v2545
      %v2562 = vsel %vm2530, %v2514, %v2546
      %v2563 = vsel %vm2531, %v2515, %v2547
      %v2564 = vsel %vm2532, %v2516, %v2548
      %v2565 = vsel %vm2533, %v2517, %v2549
      %v2566 = vsel %vm2534, %v2518, %v2550
      %v2567 = vsel %vm2535, %v2519, %v2551
      %v2568 = vsel %vm2536, %v2520, %v2552
      %v2569 = vsel %vm2537, %v2521, %v2553
      %2570 = vst.msk [vmem:[%s314] sm:$0xff] %vm1010, %v2554
      %2571 = vst.msk [vmem:[%s314 + $0x8] sm:$0xff] %vm1010, %v2555
      %2572 = vst.msk [vmem:[%s314 + $0x10] sm:$0xff] %vm1010, %v2556
      %2573 = vst.msk [vmem:[%s314 + $0x18] sm:$0xff] %vm1010, %v2557
      %2574 = vst.msk [vmem:[%s314 + $0x20] sm:$0xff] %vm1010, %v2558
      %2575 = vst.msk [vmem:[%s314 + $0x28] sm:$0xff] %vm1010, %v2559
      %2576 = vst.msk [vmem:[%s314 + $0x30] sm:$0xff] %vm1010, %v2560
      %2577 = vst.msk [vmem:[%s314 + $0x38] sm:$0xff] %vm1010, %v2561
      %2578 = vst.msk [vmem:[%s314 + $0x40] sm:$0xff] %vm1010, %v2562
      %2579 = vst.msk [vmem:[%s314 + $0x48] sm:$0xff] %vm1010, %v2563
      %2580 = vst.msk [vmem:[%s314 + $0x50] sm:$0xff] %vm1010, %v2564
      %2581 = vst.msk [vmem:[%s314 + $0x58] sm:$0xff] %vm1010, %v2565
      %2582 = vst.msk [vmem:[%s314 + $0x60] sm:$0xff] %vm1010, %v2566
      %2583 = vst.msk [vmem:[%s314 + $0x68] sm:$0xff] %vm1010, %v2567
      %2584 = vst.msk [vmem:[%s314 + $0x70] sm:$0xff] %vm1010, %v2568
      %2585 = vst.msk [vmem:[%s314 + $0x78] sm:$0xff] %vm1010, %v2569
      %p2586 = scmp.lt.s32.totalorder %s22, 1
      %s2587 = scalar_select %p2586, %s22, 1
      %p2588 = scmp.lt.s32.totalorder %s23, 1
      %s2589 = scalar_select %p2588, %s23, 1
      %s2590 = smul.addr %s2589, 16
      %s2591 = smul.addr %s2587, 32
      %s2592 = sadd.s32 %s2590, %s2591
      %s2593 = smul.addr %s2592, 8
      %s2594 = scalar_lea.vmem %s7, %s2593
      // Predicated region
      $region49: #{tpu_custom_call.1} parent=47 // pred_check
        %p2595 = pneg %p204
      $region50: #{tpu_custom_call.1} parent=47 // pred_check_branch
        %2597 = sbr.rel (%p2595) target = $region52
      $region51: #{tpu_custom_call.1} parent=47 // pred_region
        _
      $region52: #{tpu_custom_call.1} parent=47 // pred_fallthru
        _
    $region48: #{tpu_custom_call.1} parent=5 // pred_fallthru
      _
    %p2598 = scmp.le.s32.totalorder 2, %s13
    // Predicated region
    $region53: #{tpu_custom_call.1} parent=5 // pred_check
      %p2599 = pneg %p2598
    $region54: #{tpu_custom_call.1} parent=5 // pred_check_branch
      %2601 = sbr.rel (%p2599) target = $region56
    $region55: #{tpu_custom_call.1} parent=5 // pred_region
      %s2602 = ssub.s32 %s13, 2
      // Predicated region
      $region57: #{tpu_custom_call.1} parent=55 // pred_check
        %p2603 = pneg %p210
      $region58: #{tpu_custom_call.1} parent=55 // pred_check_branch
        %2605 = sbr.rel (%p2603) target = $region60
      $region59: #{tpu_custom_call.1} parent=55 // pred_region
        %p2606 = scmp.lt.s32.totalorder %s24, 1
        %s2607 = scalar_select %p2606, %s24, 1
        %p2608 = scmp.lt.s32.totalorder %s25, 1
        %s2609 = scalar_select %p2608, %s25, 1
        %s2610 = smul.addr %s2609, 16
        %s2611 = smul.addr %s2607, 32
        %s2612 = sadd.s32 %s2610, %s2611
        %s2613 = smul.addr %s2612, 8
        %s2614 = scalar_lea.vmem %s7, %s2613
      $region60: #{tpu_custom_call.1} parent=55 // pred_fallthru
        _
    $region56: #{tpu_custom_call.1} parent=5 // pred_fallthru
      _
  $region6: #{tpu_custom_call.1} parent=0 // loop_footer
    %s17 = sadd.s32 1, %s13
  $region7: #{tpu_custom_call.1} parent=0 // loop_footer_branch
    %12 = sbr.rel target = $region3
  $region8: #{tpu_custom_call.1} parent=0 // loop_exit
    _

</llo_original>
